<compile_context>
chip_gen: v7x
topology: tpu7x:2x2x1
jax: 0.10.0
libtpu: 0.0.40
codegen_flags: <defaults>
</compile_context>

<pallas_src>
import math

import jax
import jax.numpy as jnp
from jax.experimental import pallas as pl
from jax.experimental.pallas import tpu as pltpu

_TWO_PI = 2.0 * math.pi


def _ceil_div(a, b):
    return -(-a // b)


def _round_up(v, m):
    return _ceil_div(v, m) * m


def _ffpe_kernel(x_ref, bT_ref, a_ref, o_ref):
    # x_ref : (bn, dims)   block of flattened coordinates
    # bT_ref: (dims, E2)   bvals.T, f32 (grid-invariant)
    # a_ref : (1, E2)      avals,   f32 (grid-invariant)
    # o_ref : (bn, 2*E2)   output block
    E2 = bT_ref.shape[1]

    x = x_ref[...].astype(jnp.float32)          # (bn, dims)
    bT = bT_ref[...]                            # (dims, E2) already f32
    a = a_ref[...]                              # (1, E2)    already f32

    # Projection on the MXU.  t is in "cycles": out = sin/cos(2*pi*t).
    t = jnp.dot(x, bT, preferred_element_type=jnp.float32)   # (bn, E2)

    # ---- fused sincos -------------------------------------------------------
    # Shared range reduction: split t into a quarter-cycle index q and a
    # residual r in [-1/8, 1/8] cycles.  q*0.25 is exactly representable and
    # the subtraction is exact (Sterbenz), so no accuracy is lost here.
    qf = jnp.round(4.0 * t)
    r = t - 0.25 * qf
    theta = _TWO_PI * r                         # |theta| <= pi/4
    th2 = theta * theta

    # Taylor polynomials on [-pi/4, pi/4]; max abs error ~3e-7 (sin), ~3e-8 (cos).
    s0 = theta * (1.0 + th2 * (-1.0 / 6.0
                               + th2 * (1.0 / 120.0
                                        + th2 * (-1.0 / 5040.0))))
    c0 = 1.0 + th2 * (-0.5
                      + th2 * (1.0 / 24.0
                               + th2 * (-1.0 / 720.0
                                        + th2 * (1.0 / 40320.0))))

    # Quadrant select: sin(theta + k*pi/2), cos(theta + k*pi/2).
    k = jnp.bitwise_and(qf.astype(jnp.int32), 3)          # {0,1,2,3}, correct for qf<0
    swap = (k == 1) | (k == 3)
    sin_base = jnp.where(swap, c0, s0)
    cos_base = jnp.where(swap, s0, c0)
    sin_v = jnp.where(k >= 2, -sin_base, sin_base)
    cos_v = jnp.where((k == 1) | (k == 2), -cos_base, cos_base)

    # Direct half-stores (lane-dense; no lane-axis concat temporary).
    o_ref[:, :E2] = (a * sin_v).astype(o_ref.dtype)
    o_ref[:, E2:] = (a * cos_v).astype(o_ref.dtype)


def ff_positional_encoding(x, bvals, avals, *, block_rows=4096):
    """Fourier-feature positional encoding.

    x:     (..., dims) coordinates
    bvals: (embedding_size // 2, dims) frequency matrix (non-trainable parameter)
    avals: (embedding_size // 2,)      amplitudes       (non-trainable parameter)
    returns (..., embedding_size)
    """
    *lead, dims = x.shape
    E2, b_dims = bvals.shape
    assert b_dims == dims, "bvals last dim must match coordinate dims"
    E = 2 * E2
    N = math.prod(lead) if lead else 1

    x2d = x.reshape(N, dims)                         # metadata-only reshape
    bT = jnp.transpose(bvals).astype(jnp.float32)    # (dims, E2) — tiny, cast once
    a2d = avals.reshape(1, E2).astype(jnp.float32)   # (1, E2)

    # --- tile sizing ----------------------------------------------------------
    itemsize = jnp.dtype(x.dtype).itemsize
    sublane = {4: 8, 2: 16, 1: 32}.get(itemsize, 8)  # (8,128) rule scales with packing

    # VMEM budget: double-buffered output block + double-buffered lane-padded x
    # block, kept well under the 32 MiB scoped default (and v7x's 64 MiB VMEM).
    budget_bytes = 20 * 1024 * 1024
    per_row_bytes = 2 * E * itemsize + 2 * 128 * itemsize
    vmem_cap_rows = max(sublane, (budget_bytes // per_row_bytes) // sublane * sublane)

    bn = max(sublane, (block_rows // sublane) * sublane)
    bn = min(bn, vmem_cap_rows)

    # Guarantee >=2 grid steps on mid/large inputs so the "parallel" grid axis
    # can shard rows across both TensorCores on v7x.
    if N > 2048:
        bn = min(bn, _round_up(_ceil_div(N, 2), sublane))
    if bn >= N:
        bn = N                                       # single full block (legal)
    grid = (_ceil_div(N, bn),)                       # ragged last block masked by Pallas

    cost = pl.CostEstimate(
        flops=int(N * E2 * (2 * dims + 36)),         # matmul + fused-sincos polynomial
        transcendentals=0,                           # sincos is hand-rolled on the VPU
        bytes_accessed=int(N * (dims + E) * itemsize + (dims + 1) * E2 * 4),
    )

    out2d = pl.pallas_call(
        _ffpe_kernel,
        out_shape=jax.ShapeDtypeStruct((N, E), x.dtype),
        grid_spec=pltpu.PrefetchScalarGridSpec(
            num_scalar_prefetch=0,
            grid=grid,
            in_specs=[
                pl.BlockSpec((bn, dims), lambda i: (i, 0)),   # x rows
                pl.BlockSpec((dims, E2), lambda i: (0, 0)),   # bvals.T (invariant)
                pl.BlockSpec((1, E2), lambda i: (0, 0)),      # avals   (invariant)
            ],
            out_specs=pl.BlockSpec((bn, E), lambda i: (i, 0)),
        ),
        compiler_params=pltpu.CompilerParams(
            dimension_semantics=("parallel",),       # shard rows across TCs on v7x
            vmem_limit_bytes=32 * 1024 * 1024,
        ),
        cost_estimate=cost,
    )(x2d, bT, a2d)

    return out2d.reshape(*lead, E) if lead else out2d.reshape(E)


if __name__ == "__main__":
    key = jax.random.PRNGKey(0)
    k_b, k_b3, k_x1, k_x2, k_x3 = jax.random.split(key, 5)

    # Module config (gaussian=True path): embedding_size=256, scale=1.0
    embedding_size, scale = 256, 1.0
    E2 = embedding_size // 2

    def ref(x, bvals, avals):
        proj = 2.0 * jnp.pi * (x @ bvals.T)
        return jnp.concatenate(
            [avals * jnp.sin(proj), avals * jnp.cos(proj)], axis=-1)

    # ---- Case 1: dims=2, evenly tiled — (2, 256, 2), block_rows=256 -> grid (2,)
    dims = 2
    bvals = jax.random.normal(k_b, (E2, dims), dtype=jnp.float32) * scale
    avals = jnp.ones((E2,), dtype=jnp.float32)
    x1 = jax.random.uniform(k_x1, (2, 256, dims), jnp.float32, minval=-1.0, maxval=1.0)
    y1 = jax.block_until_ready(ff_positional_encoding(x1, bvals, avals, block_rows=256))
    assert y1.shape == (2, 256, embedding_size) and y1.dtype == x1.dtype
    assert jnp.allclose(y1, ref(x1, bvals, avals), atol=1e-4, rtol=1e-4)

    # ---- Case 2: ragged last block — (2, 200, 2) -> N=400 rows, block 256
    x2 = jax.random.uniform(k_x2, (2, 200, dims), jnp.float32, minval=-1.0, maxval=1.0)
    y2 = jax.block_until_ready(ff_positional_encoding(x2, bvals, avals, block_rows=256))
    assert y2.shape == (2, 200, embedding_size)
    assert jnp.allclose(y2, ref(x2, bvals, avals), atol=1e-4, rtol=1e-4)

    # ---- Case 3: dims=3, N=4096 > 2048 -> multi-step grid (dual-TC path on v7x)
    dims3 = 3
    bvals3 = jax.random.normal(k_b3, (E2, dims3), dtype=jnp.float32) * scale
    x3 = jax.random.uniform(k_x3, (4, 1024, dims3), jnp.float32, minval=-1.0, maxval=1.0)
    y3 = jax.block_until_ready(ff_positional_encoding(x3, bvals3, avals))
    assert y3.shape == (4, 1024, embedding_size)
    assert jnp.allclose(y3, ref(x3, bvals3, avals), atol=1e-4, rtol=1e-4)

    print("KERNEL_OK")
</pallas_src>

<mosaic_0001>
module attributes {stable_mosaic.version = 11 : i64} {
  func.func @_ffpe_kernel(%arg0: i32, %arg1: memref<256x2xf32, #tpu.memory_space<vmem>>, %arg2: memref<2x128xf32, #tpu.memory_space<vmem>>, %arg3: memref<1x128xf32, #tpu.memory_space<vmem>>, %arg4: memref<256x256xf32, #tpu.memory_space<vmem>>) attributes {dimension_semantics = [#tpu.dimension_semantics<parallel>], iteration_bounds = array<i64: 2>, scalar_prefetch = 0 : i64, scratch_operands = 0 : i64, tpu.core_type = #tpu.core_type<tc>, window_params = [{transform_indices = @transform_0, window_bounds = array<i64: 256, 2>}, {pipeline_mode = #tpu.pipeline_mode<synchronous>, transform_indices = @transform_1, window_bounds = array<i64: 2, 128>}, {pipeline_mode = #tpu.pipeline_mode<synchronous>, transform_indices = @transform_2, window_bounds = array<i64: 1, 128>}, {transform_indices = @transform_3, window_bounds = array<i64: 256, 256>}]} {
    %c0 = arith.constant 0 : index
    %c0_0 = arith.constant 0 : index
    %0 = vector.load %arg1[%c0, %c0_0] : memref<256x2xf32, #tpu.memory_space<vmem>>, vector<256x2xf32>
    %c0_1 = arith.constant 0 : index
    %c0_2 = arith.constant 0 : index
    %1 = vector.load %arg2[%c0_1, %c0_2] : memref<2x128xf32, #tpu.memory_space<vmem>>, vector<2x128xf32>
    %c0_3 = arith.constant 0 : index
    %c0_4 = arith.constant 0 : index
    %2 = vector.load %arg3[%c0_3, %c0_4] : memref<1x128xf32, #tpu.memory_space<vmem>>, vector<1x128xf32>
    %cst = arith.constant dense<0.000000e+00> : vector<256x128xf32>
    %3 = tpu.matmul %0, %1, %cst {dimension_numbers = #tpu.dot_dimension_numbers<[1], [0], [0], [1], [0, 0, 1, 1], [], []>} : vector<256x2xf32>, vector<2x128xf32>, vector<256x128xf32> -> vector<256x128xf32>
    %cst_5 = arith.constant 4.000000e+00 : f32
    %4 = vector.broadcast %cst_5 : f32 to vector<256x128xf32>
    %5 = arith.mulf %4, %3 : vector<256x128xf32>
    %6 = math.roundeven %5 : vector<256x128xf32>
    %cst_6 = arith.constant 2.500000e-01 : f32
    %7 = vector.broadcast %cst_6 : f32 to vector<256x128xf32>
    %8 = arith.mulf %7, %6 : vector<256x128xf32>
    %9 = arith.subf %3, %8 : vector<256x128xf32>
    %cst_7 = arith.constant 6.28318548 : f32
    %10 = vector.broadcast %cst_7 : f32 to vector<256x128xf32>
    %11 = arith.mulf %10, %9 : vector<256x128xf32>
    %12 = arith.mulf %11, %11 : vector<256x128xf32>
    %cst_8 = arith.constant -1.98412701E-4 : f32
    %13 = vector.broadcast %cst_8 : f32 to vector<256x128xf32>
    %14 = arith.mulf %12, %13 : vector<256x128xf32>
    %cst_9 = arith.constant 0.00833333377 : f32
    %15 = vector.broadcast %cst_9 : f32 to vector<256x128xf32>
    %16 = arith.addf %15, %14 : vector<256x128xf32>
    %17 = arith.mulf %12, %16 : vector<256x128xf32>
    %cst_10 = arith.constant -0.166666672 : f32
    %18 = vector.broadcast %cst_10 : f32 to vector<256x128xf32>
    %19 = arith.addf %18, %17 : vector<256x128xf32>
    %20 = arith.mulf %12, %19 : vector<256x128xf32>
    %cst_11 = arith.constant 1.000000e+00 : f32
    %21 = vector.broadcast %cst_11 : f32 to vector<256x128xf32>
    %22 = arith.addf %21, %20 : vector<256x128xf32>
    %23 = arith.mulf %11, %22 : vector<256x128xf32>
    %cst_12 = arith.constant 2.48015876E-5 : f32
    %24 = vector.broadcast %cst_12 : f32 to vector<256x128xf32>
    %25 = arith.mulf %12, %24 : vector<256x128xf32>
    %cst_13 = arith.constant -0.00138888892 : f32
    %26 = vector.broadcast %cst_13 : f32 to vector<256x128xf32>
    %27 = arith.addf %26, %25 : vector<256x128xf32>
    %28 = arith.mulf %12, %27 : vector<256x128xf32>
    %cst_14 = arith.constant 0.0416666679 : f32
    %29 = vector.broadcast %cst_14 : f32 to vector<256x128xf32>
    %30 = arith.addf %29, %28 : vector<256x128xf32>
    %31 = arith.mulf %12, %30 : vector<256x128xf32>
    %cst_15 = arith.constant -5.000000e-01 : f32
    %32 = vector.broadcast %cst_15 : f32 to vector<256x128xf32>
    %33 = arith.addf %32, %31 : vector<256x128xf32>
    %34 = arith.mulf %12, %33 : vector<256x128xf32>
    %cst_16 = arith.constant 1.000000e+00 : f32
    %35 = vector.broadcast %cst_16 : f32 to vector<256x128xf32>
    %36 = arith.addf %35, %34 : vector<256x128xf32>
    %37 = arith.fptosi %6 : vector<256x128xf32> to vector<256x128xi32>
    %c3_i32 = arith.constant 3 : i32
    %38 = vector.broadcast %c3_i32 : i32 to vector<256x128xi32>
    %39 = arith.andi %37, %38 : vector<256x128xi32>
    %c1_i32 = arith.constant 1 : i32
    %40 = vector.broadcast %c1_i32 : i32 to vector<256x128xi32>
    %41 = arith.cmpi eq, %39, %40 : vector<256x128xi32>
    %c3_i32_17 = arith.constant 3 : i32
    %42 = vector.broadcast %c3_i32_17 : i32 to vector<256x128xi32>
    %43 = arith.cmpi eq, %39, %42 : vector<256x128xi32>
    %44 = arith.ori %41, %43 : vector<256x128xi1>
    %45 = arith.select %44, %36, %23 : vector<256x128xi1>, vector<256x128xf32>
    %46 = arith.select %44, %23, %36 : vector<256x128xi1>, vector<256x128xf32>
    %c2_i32 = arith.constant 2 : i32
    %47 = vector.broadcast %c2_i32 : i32 to vector<256x128xi32>
    %48 = arith.cmpi sge, %39, %47 : vector<256x128xi32>
    %cst_18 = arith.constant 0.000000e+00 : f32
    %49 = vector.broadcast %cst_18 : f32 to vector<256x128xf32>
    %50 = arith.subf %49, %45 : vector<256x128xf32>
    %51 = arith.select %48, %50, %45 : vector<256x128xi1>, vector<256x128xf32>
    %c1_i32_19 = arith.constant 1 : i32
    %52 = vector.broadcast %c1_i32_19 : i32 to vector<256x128xi32>
    %53 = arith.cmpi eq, %39, %52 : vector<256x128xi32>
    %c2_i32_20 = arith.constant 2 : i32
    %54 = vector.broadcast %c2_i32_20 : i32 to vector<256x128xi32>
    %55 = arith.cmpi eq, %39, %54 : vector<256x128xi32>
    %56 = arith.ori %53, %55 : vector<256x128xi1>
    %cst_21 = arith.constant 0.000000e+00 : f32
    %57 = vector.broadcast %cst_21 : f32 to vector<256x128xf32>
    %58 = arith.subf %57, %46 : vector<256x128xf32>
    %59 = arith.select %56, %58, %46 : vector<256x128xi1>, vector<256x128xf32>
    %60 = vector.broadcast %2 : vector<1x128xf32> to vector<256x128xf32>
    %61 = arith.mulf %60, %51 : vector<256x128xf32>
    %c0_22 = arith.constant 0 : index
    %c0_23 = arith.constant 0 : index
    %62 = vector.load %arg4[%c0_22, %c0_23] : memref<256x256xf32, #tpu.memory_space<vmem>>, vector<256x128xf32>
    tpu.vector_store %arg4[%c0_22, %c0_23], %61 {strides = array<i32>} : memref<256x256xf32, #tpu.memory_space<vmem>>, vector<256x128xf32>,
    %63 = vector.broadcast %2 : vector<1x128xf32> to vector<256x128xf32>
    %64 = arith.mulf %63, %59 : vector<256x128xf32>
    %c0_24 = arith.constant 0 : index
    %c128 = arith.constant 128 : index
    %65 = vector.load %arg4[%c0_24, %c128] : memref<256x256xf32, #tpu.memory_space<vmem>>, vector<256x128xf32>
    tpu.vector_store %arg4[%c0_24, %c128], %64 {strides = array<i32>} : memref<256x256xf32, #tpu.memory_space<vmem>>, vector<256x128xf32>,
    return
  }
  func.func @transform_0(%arg0: i32) -> (i32, i32) {
    %c0_i32 = arith.constant 0 : i32
    %c0_i32_0 = arith.constant 0 : i32
    return %arg0, %c0_i32 : i32, i32
  }
  func.func @transform_1(%arg0: i32) -> (i32, i32) {
    %c0_i32 = arith.constant 0 : i32
    %c0_i32_0 = arith.constant 0 : i32
    %c0_i32_1 = arith.constant 0 : i32
    return %c0_i32, %c0_i32_0 : i32, i32
  }
  func.func @transform_2(%arg0: i32) -> (i32, i32) {
    %c0_i32 = arith.constant 0 : i32
    %c0_i32_0 = arith.constant 0 : i32
    %c0_i32_1 = arith.constant 0 : i32
    return %c0_i32, %c0_i32_0 : i32, i32
  }
  func.func @transform_3(%arg0: i32) -> (i32, i32) {
    %c0_i32 = arith.constant 0 : i32
    %c0_i32_0 = arith.constant 0 : i32
    return %arg0, %c0_i32 : i32, i32
  }
}

</mosaic_0001>

<llo_original>
// kernel: tpu_custom_call.1
$region0: #{tpu_custom_call.1}
  #allocation0 [shape = 'u32[]', space=smem, size = 0x4, offset = 0x4, fixed_abs, tag = 'smem constant byte address 0x4 - core index']
  #allocation1 [shape = 'u32[144,128]{1,0:T(1,128)}', space=vmem, size = 0x12000, scoped, tag = 'internal scratch']
  %s0 = inlined_call_operand.vmem [shape: f32[512,2], index: 0, kind: input, shape index: {}]
  %s1 = inlined_call_operand.vmem [shape: f32[2,128], index: 1, kind: input, shape index: {}]
  %s2 = inlined_call_operand.vmem [shape: f32[1,128], index: 2, kind: input, shape index: {}]
  %s3 = inlined_call_operand.hbm [shape: f32[512,256], index: 3, kind: output, shape index: {}]
  %s4 = sld [smem:[#allocation0]]
  $region45: #{tpu_custom_call.1} parent=0
    _
  %s6 = ssub.s32 1, %s4
  %s7 = scalar_select 0, %s6, %s4
  $region1: #{tpu_custom_call.1} parent=0
    #allocation2 [shape = 'u8[524288]{0}', space=vmem, size = 0x80000, scoped, tag = 'output window, operand 0']
    #allocation3 [shape = 's32[2]{0}', space=sflag, size = 0x8, scoped, tag = 'scoped memory for tpu_custom_call.1']
    %8 = vsyncpa [#allocation3], 0
    %s9 = scalar_lea.sflag [#allocation3], 1
    %10 = vsyncpa %s9, 0
    loop: start=0, step=1, limit=4
    $region2: #{tpu_custom_call.1} parent=1 // loop_pre_header
      _
    $region3: #{tpu_custom_call.1} parent=1 // loop_header
      %s12 = sphi 0, %s16
      %p13 = scmp.ge.s32.totalorder %s12, 4
      %s22 = sphi 0, %s24
      %s25 = sphi 0, %s22
      %s26 = sphi 0, %s25
      %s42 = sphi 0, %s26
      %s46 = sphi 0, %s46
      %s48 = sphi 0, %s46
      %s49 = sphi 0, %s48
      %s63 = sphi 0, %s49
      %s67 = sphi 0, %s67
      %s69 = sphi 0, %s67
      %s70 = sphi 0, %s69
      %s84 = sphi 0, %s70
      %s90 = sphi 0, %s92
      %s93 = sphi 0, %s90
      %s94 = sphi 0, %s93
      %s110 = sphi 0, %s94
    $region4: #{tpu_custom_call.1} parent=1 // loop_header_branch
      %15 = sbr.rel (%p13) target = $region8
    $region5: #{tpu_custom_call.1} parent=1 // loop_body
      %s17 = ssub.s32 %s12, 1
      %s18 = ssub.s32 %s12, 2
      %s19 = sadd.s32 %s12, 1
      %s20 = ssub.s32 %s12, %s19
      %p21 = scmp.eq.s32.totalorder %s20, 0
      %s23 = sadd.s32 %s22, 1
      %s24 = scalar_select %p21, %s22, %s23
      %p27 = pneg %p21
      %p28 = scmp.eq.s32.totalorder %s12, 1
      %p29 = por %p27, %p28
      %p30 = scmp.ne.s32.totalorder %s22, %s25
      %p31 = scmp.eq.s32.totalorder %s12, 0
      %p32 = por %p30, %p31
      %p33 = scmp.ne.s32.totalorder %s22, %s25
      %p34 = scmp.eq.s32.totalorder %s17, 1
      %p35 = por %p33, %p34
      %p36 = scmp.ne.s32.totalorder %s25, %s26
      %p37 = scmp.eq.s32.totalorder %s17, 0
      %p38 = por %p36, %p37
      %p39 = scmp.ne.s32.totalorder %s25, %s26
      %p40 = scmp.eq.s32.totalorder %s18, 1
      %p41 = por %p39, %p40
      %p43 = scmp.ne.s32.totalorder %s26, %s42
      %p44 = scmp.eq.s32.totalorder %s18, 0
      %p45 = por %p43, %p44
      %s47 = sadd.s32 %s46, 1
      %p50 = scmp.eq.s32.totalorder %s12, 1
      %p51 = scmp.ne.s32.totalorder %s46, %s48
      %p52 = scmp.eq.s32.totalorder %s12, 0
      %p53 = por %p51, %p52
      %p54 = scmp.ne.s32.totalorder %s46, %s48
      %p55 = scmp.eq.s32.totalorder %s17, 1
      %p56 = por %p54, %p55
      %p57 = scmp.ne.s32.totalorder %s48, %s49
      %p58 = scmp.eq.s32.totalorder %s17, 0
      %p59 = por %p57, %p58
      %p60 = scmp.ne.s32.totalorder %s48, %s49
      %p61 = scmp.eq.s32.totalorder %s18, 1
      %p62 = por %p60, %p61
      %p64 = scmp.ne.s32.totalorder %s49, %s63
      %p65 = scmp.eq.s32.totalorder %s18, 0
      %p66 = por %p64, %p65
      %s68 = sadd.s32 %s67, 1
      %p71 = scmp.eq.s32.totalorder %s12, 1
      %p72 = scmp.ne.s32.totalorder %s67, %s69
      %p73 = scmp.eq.s32.totalorder %s12, 0
      %p74 = por %p72, %p73
      %p75 = scmp.ne.s32.totalorder %s67, %s69
      %p76 = scmp.eq.s32.totalorder %s17, 1
      %p77 = por %p75, %p76
      %p78 = scmp.ne.s32.totalorder %s69, %s70
      %p79 = scmp.eq.s32.totalorder %s17, 0
      %p80 = por %p78, %p79
      %p81 = scmp.ne.s32.totalorder %s69, %s70
      %p82 = scmp.eq.s32.totalorder %s18, 1
      %p83 = por %p81, %p82
      %p85 = scmp.ne.s32.totalorder %s70, %s84
      %p86 = scmp.eq.s32.totalorder %s18, 0
      %p87 = por %p85, %p86
      %s88 = ssub.s32 %s12, %s19
      %p89 = scmp.eq.s32.totalorder %s88, 0
      %s91 = sadd.s32 %s90, 1
      %s92 = scalar_select %p89, %s90, %s91
      %p95 = pneg %p89
      %p96 = scmp.eq.s32.totalorder %s12, 1
      %p97 = por %p95, %p96
      %p98 = scmp.ne.s32.totalorder %s90, %s93
      %p99 = scmp.eq.s32.totalorder %s12, 0
      %p100 = por %p98, %p99
      %p101 = scmp.ne.s32.totalorder %s90, %s93
      %p102 = scmp.eq.s32.totalorder %s17, 1
      %p103 = por %p101, %p102
      %p104 = scmp.ne.s32.totalorder %s93, %s94
      %p105 = scmp.eq.s32.totalorder %s17, 0
      %p106 = por %p104, %p105
      %p107 = scmp.ne.s32.totalorder %s93, %s94
      %p108 = scmp.eq.s32.totalorder %s18, 1
      %p109 = por %p107, %p108
      %p111 = scmp.ne.s32.totalorder %s94, %s110
      %p112 = scmp.eq.s32.totalorder %s18, 0
      %p113 = por %p111, %p112
      %p114 = scmp.le.s32.totalorder 1, %s12
      %p115 = scmp.lt.s32.totalorder %s12, 3
      %p116 = pnand %p114, %p115
      %p117 = pneg %p116
      // Predicated region
      $region9: #{tpu_custom_call.1} parent=5 // pred_check
        _
      $region10: #{tpu_custom_call.1} parent=5 // pred_check_branch
        %119 = sbr.rel (%p116) target = $region12
      $region11: #{tpu_custom_call.1} parent=5 // pred_region
        %s120 = ssub.s32 %s12, 1
        // Predicated region
        $region13: #{tpu_custom_call.1} parent=11 // pred_check
          %p121 = pneg %p59
        $region14: #{tpu_custom_call.1} parent=11 // pred_check_branch
          %123 = sbr.rel (%p121) target = $region16
        $region15: #{tpu_custom_call.1} parent=11 // pred_region
          _
        $region16: #{tpu_custom_call.1} parent=11 // pred_fallthru
          _
        // Predicated region
        $region17: #{tpu_custom_call.1} parent=11 // pred_check
          %p124 = pneg %p80
        $region18: #{tpu_custom_call.1} parent=11 // pred_check_branch
          %126 = sbr.rel (%p124) target = $region20
        $region19: #{tpu_custom_call.1} parent=11 // pred_region
          _
        $region20: #{tpu_custom_call.1} parent=11 // pred_fallthru
          _
      $region12: #{tpu_custom_call.1} parent=5 // pred_fallthru
        _
      %p127 = scmp.lt.s32.totalorder %s12, 2
      // Predicated region
      $region21: #{tpu_custom_call.1} parent=5 // pred_check
        %p128 = pneg %p127
      $region22: #{tpu_custom_call.1} parent=5 // pred_check_branch
        %130 = sbr.rel (%p128) target = $region24
      $region23: #{tpu_custom_call.1} parent=5 // pred_region
        // Predicated region
        $region25: #{tpu_custom_call.1} parent=23 // pred_check
          %p131 = pneg %p32
        $region26: #{tpu_custom_call.1} parent=23 // pred_check_branch
          %133 = sbr.rel (%p131) target = $region28
        $region27: #{tpu_custom_call.1} parent=23 // pred_region
          %s134 = smul.u32 32, %s12
          %p135 = scmp.lt.s32.totalorder %s134, 63
          %s136 = scalar_select %p135, %s134, 63
          %s137 = smul.addr %s136, 8
          %s138 = scalar_lea.vmem %s0, %s137
          %s139 = smul.u32 32, %s12
        $region28: #{tpu_custom_call.1} parent=23 // pred_fallthru
          _
      $region24: #{tpu_custom_call.1} parent=5 // pred_fallthru
        _
      %p140 = scmp.le.s32.totalorder 1, %s12
      %p141 = scmp.lt.s32.totalorder %s12, 3
      %p142 = pnand %p140, %p141
      %p143 = pneg %p142
      // Predicated region
      $region29: #{tpu_custom_call.1} parent=5 // pred_check
        _
      $region30: #{tpu_custom_call.1} parent=5 // pred_check_branch
        %145 = sbr.rel (%p142) target = $region32
      $region31: #{tpu_custom_call.1} parent=5 // pred_region
        %s146 = ssub.s32 %s12, 1
        %s147 = smul.u32 32, %s17
        %p148 = scmp.lt.s32.totalorder %s147, 63
        %s149 = scalar_select %p148, %s147, 63
        %s150 = smul.addr %s149, 8
        %s151 = scalar_lea.vmem %s0, %s150
        %p152 = pneg %p38
        %p153 = pneg %p35
        %p154 = pneg %p59
        %p155 = pneg %p56
        %p156 = pneg %p80
        %p157 = pneg %p77
        %p158 = pneg %p106
        %p159 = pneg %p103
        %s160 = sand.u32 %s93, 1
        %s161 = scalar_lea.sflag [#allocation3], %s160
        %s162 = sand.u32 %s93, 1
        %s163 = smul.addr %s162, 512
        %s164 = scalar_lea.vmem [#allocation2], %s163
        %s165 = smul.u32 32, %s17
        %p166 = scmp.lt.s32.totalorder %s165, 63
        %s167 = scalar_select %p166, %s165, 63
        %s168 = smul.addr %s167, 8
        %s169 = scalar_lea.vmem %s0, %s168
        %s170 = smul.u32 32, %s17
        %s171 = smul.u32 32, %s17
        %v172 = vld [vmem:[%s169] sm:$0xff]
        %v173 = vld [vmem:[%s169 + $0x8] sm:$0xff]
        %v174 = vld [vmem:[%s169 + $0x10] sm:$0xff]
        %v175 = vld [vmem:[%s169 + $0x18] sm:$0xff]
        %v176 = vld [vmem:[%s169 + $0x20] sm:$0xff]
        %v177 = vld [vmem:[%s169 + $0x28] sm:$0xff]
        %v178 = vld [vmem:[%s169 + $0x30] sm:$0xff]
        %v179 = vld [vmem:[%s169 + $0x38] sm:$0xff]
        %v180 = vld [vmem:[%s169 + $0x40] sm:$0xff]
        %v181 = vld [vmem:[%s169 + $0x48] sm:$0xff]
        %v182 = vld [vmem:[%s169 + $0x50] sm:$0xff]
        %v183 = vld [vmem:[%s169 + $0x58] sm:$0xff]
        %v184 = vld [vmem:[%s169 + $0x60] sm:$0xff]
        %v185 = vld [vmem:[%s169 + $0x68] sm:$0xff]
        %v186 = vld [vmem:[%s169 + $0x70] sm:$0xff]
        %v187 = vld [vmem:[%s169 + $0x78] sm:$0xff]
        %v188 = vld [vmem:[%s169 + $0x80] sm:$0xff]
        %v189 = vld [vmem:[%s169 + $0x88] sm:$0xff]
        %v190 = vld [vmem:[%s169 + $0x90] sm:$0xff]
        %v191 = vld [vmem:[%s169 + $0x98] sm:$0xff]
        %v192 = vld [vmem:[%s169 + $0xa0] sm:$0xff]
        %v193 = vld [vmem:[%s169 + $0xa8] sm:$0xff]
        %v194 = vld [vmem:[%s169 + $0xb0] sm:$0xff]
        %v195 = vld [vmem:[%s169 + $0xb8] sm:$0xff]
        %v196 = vld [vmem:[%s169 + $0xc0] sm:$0xff]
        %v197 = vld [vmem:[%s169 + $0xc8] sm:$0xff]
        %v198 = vld [vmem:[%s169 + $0xd0] sm:$0xff]
        %v199 = vld [vmem:[%s169 + $0xd8] sm:$0xff]
        %v200 = vld [vmem:[%s169 + $0xe0] sm:$0xff]
        %v201 = vld [vmem:[%s169 + $0xe8] sm:$0xff]
        %v202 = vld [vmem:[%s169 + $0xf0] sm:$0xff]
        %v203 = vld [vmem:[%s169 + $0xf8] sm:$0xff]
        %v204 = vld [vmem:[%s1] sm:$0x3]
        %v205 = vld [vmem:[%s2] sm:$0x1]
        %vm206 = vcmask 15360
        %v208 = vsel %vm206, %v172, 0
        %v211 = vsel %vm206, %v173, 0
        %v214 = vsel %vm206, %v174, 0
        %v217 = vsel %vm206, %v175, 0
        %v220 = vsel %vm206, %v176, 0
        %v223 = vsel %vm206, %v177, 0
        %v226 = vsel %vm206, %v178, 0
        %v229 = vsel %vm206, %v179, 0
        %v232 = vsel %vm206, %v180, 0
        %v235 = vsel %vm206, %v181, 0
        %v238 = vsel %vm206, %v182, 0
        %v241 = vsel %vm206, %v183, 0
        %v244 = vsel %vm206, %v184, 0
        %v247 = vsel %vm206, %v185, 0
        %v250 = vsel %vm206, %v186, 0
        %v253 = vsel %vm206, %v187, 0
        %v256 = vsel %vm206, %v188, 0
        %v259 = vsel %vm206, %v189, 0
        %v262 = vsel %vm206, %v190, 0
        %v265 = vsel %vm206, %v191, 0
        %v268 = vsel %vm206, %v192, 0
        %v271 = vsel %vm206, %v193, 0
        %v274 = vsel %vm206, %v194, 0
        %v277 = vsel %vm206, %v195, 0
        %v280 = vsel %vm206, %v196, 0
        %v283 = vsel %vm206, %v197, 0
        %v286 = vsel %vm206, %v198, 0
        %v289 = vsel %vm206, %v199, 0
        %v292 = vsel %vm206, %v200, 0
        %v295 = vsel %vm206, %v201, 0
        %v298 = vsel %vm206, %v202, 0
        %v301 = vsel %vm206, %v203, 0
        %vm303 = vcmask 1041408
        %v305 = vsel %vm303, %v204, 0
        %307 = vmatprep.subr.mxu0 0.0
        %308 = vmatpush1.msra.mxu0 %v305
        %309 = vmatprep.subr.mxu0 0.0
        %310 = vmatpush1.msra.mxu0 0.0
        %311 = vmatprep.subr.mxu0 0.0
        %312 = vmatpush1.msra.mxu0 0.0
        %313 = vmatprep.subr.mxu0 0.0
        %314 = vmatpush1.msra.mxu0 0.0
        %315 = vmatprep.subr.mxu0 0.0
        %316 = vmatpush1.msra.mxu0 0.0
        %317 = vmatprep.subr.mxu0 0.0
        %318 = vmatpush1.msra.mxu0 0.0
        %319 = vmatprep.subr.mxu0 0.0
        %320 = vmatpush1.msra.mxu0 0.0
        %321 = vmatprep.subr.mxu0 0.0
        %322 = vmatpush1.msra.mxu0 0.0
        %323 = vmatprep.subr.mxu0 0.0
        %324 = vmatpush1.msra.mxu0 0.0
        %325 = vmatprep.subr.mxu0 0.0
        %326 = vmatpush1.msra.mxu0 0.0
        %327 = vmatprep.subr.mxu0 0.0
        %328 = vmatpush1.msra.mxu0 0.0
        %329 = vmatprep.subr.mxu0 0.0
        %330 = vmatpush1.msra.mxu0 0.0
        %331 = vmatprep.subr.mxu0 0.0
        %332 = vmatpush1.msra.mxu0 0.0
        %333 = vmatprep.subr.mxu0 0.0
        %334 = vmatpush1.msra.mxu0 0.0
        %335 = vmatprep.subr.mxu0 0.0
        %336 = vmatpush1.msra.mxu0 0.0
        %337 = vmatprep.subr.mxu0 0.0
        %338 = vmatpush1.msra.mxu0 0.0
        %339 = vmatprep.subr.mxu0 0.0
        %340 = vmatpush1.msra.mxu0 0.0
        %341 = vmatprep.subr.mxu0 0.0
        %342 = vmatpush1.msra.mxu0 0.0
        %343 = vmatprep.subr.mxu0 0.0
        %344 = vmatpush1.msra.mxu0 0.0
        %345 = vmatprep.subr.mxu0 0.0
        %346 = vmatpush1.msra.mxu0 0.0
        %347 = vmatprep.subr.mxu0 0.0
        %348 = vmatpush1.msra.mxu0 0.0
        %349 = vmatprep.subr.mxu0 0.0
        %350 = vmatpush1.msra.mxu0 0.0
        %351 = vmatprep.subr.mxu0 0.0
        %352 = vmatpush1.msra.mxu0 0.0
        %353 = vmatprep.subr.mxu0 0.0
        %354 = vmatpush1.msra.mxu0 0.0
        %355 = vmatprep.subr.mxu0 0.0
        %356 = vmatpush1.msra.mxu0 0.0
        %357 = vmatprep.subr.mxu0 0.0
        %358 = vmatpush1.msra.mxu0 0.0
        %359 = vmatprep.subr.mxu0 0.0
        %360 = vmatpush1.msra.mxu0 0.0
        %361 = vmatprep.subr.mxu0 0.0
        %362 = vmatpush1.msra.mxu0 0.0
        %363 = vmatprep.subr.mxu0 0.0
        %364 = vmatpush1.msra.mxu0 0.0
        %365 = vmatprep.subr.mxu0 0.0
        %366 = vmatpush1.msra.mxu0 0.0
        %367 = vmatprep.subr.mxu0 0.0
        %368 = vmatpush1.msra.mxu0 0.0
        %369 = vmatprep.subr.mxu0 0.0
        %370 = vmatpush1.msra.mxu0 0.0
        %371 = vmatprep.mubr.f32.mxu0 0.0
        %372 = vmatmul.mubr.f32.gmra.mrb[0].mxu0 %v208
        %v373 = vpop.f32.mrb[0].mxu0
        %v374 = vadd.f32 0.0, %v373
        %v375 = vpop.f32.mrb[0].mxu0
        %376 = vmatprep.mubr.f32.mxu0 0.0
        %377 = vmatmul.mubr.f32.gmra.mrb[0].mxu0 %v211
        %v378 = vpop.f32.mrb[0].mxu0
        %v379 = vadd.f32 0.0, %v378
        %v380 = vpop.f32.mrb[0].mxu0
        %381 = vmatprep.mubr.f32.mxu0 0.0
        %382 = vmatmul.mubr.f32.gmra.mrb[0].mxu0 %v214
        %v383 = vpop.f32.mrb[0].mxu0
        %v384 = vadd.f32 0.0, %v383
        %v385 = vpop.f32.mrb[0].mxu0
        %386 = vmatprep.mubr.f32.mxu0 0.0
        %387 = vmatmul.mubr.f32.gmra.mrb[0].mxu0 %v217
        %v388 = vpop.f32.mrb[0].mxu0
        %v389 = vadd.f32 0.0, %v388
        %v390 = vpop.f32.mrb[0].mxu0
        %391 = vmatprep.mubr.f32.mxu0 0.0
        %392 = vmatmul.mubr.f32.gmra.mrb[0].mxu0 %v220
        %v393 = vpop.f32.mrb[0].mxu0
        %v394 = vadd.f32 0.0, %v393
        %v395 = vpop.f32.mrb[0].mxu0
        %396 = vmatprep.mubr.f32.mxu0 0.0
        %397 = vmatmul.mubr.f32.gmra.mrb[0].mxu0 %v223
        %v398 = vpop.f32.mrb[0].mxu0
        %v399 = vadd.f32 0.0, %v398
        %v400 = vpop.f32.mrb[0].mxu0
        %401 = vmatprep.mubr.f32.mxu0 0.0
        %402 = vmatmul.mubr.f32.gmra.mrb[0].mxu0 %v226
        %v403 = vpop.f32.mrb[0].mxu0
        %v404 = vadd.f32 0.0, %v403
        %v405 = vpop.f32.mrb[0].mxu0
        %406 = vmatprep.mubr.f32.mxu0 0.0
        %407 = vmatmul.mubr.f32.gmra.mrb[0].mxu0 %v229
        %v408 = vpop.f32.mrb[0].mxu0
        %v409 = vadd.f32 0.0, %v408
        %v410 = vpop.f32.mrb[0].mxu0
        %411 = vmatprep.mubr.f32.mxu0 0.0
        %412 = vmatmul.mubr.f32.gmra.mrb[0].mxu0 %v232
        %v413 = vpop.f32.mrb[0].mxu0
        %v414 = vadd.f32 0.0, %v413
        %v415 = vpop.f32.mrb[0].mxu0
        %416 = vmatprep.mubr.f32.mxu0 0.0
        %417 = vmatmul.mubr.f32.gmra.mrb[0].mxu0 %v235
        %v418 = vpop.f32.mrb[0].mxu0
        %v419 = vadd.f32 0.0, %v418
        %v420 = vpop.f32.mrb[0].mxu0
        %421 = vmatprep.mubr.f32.mxu0 0.0
        %422 = vmatmul.mubr.f32.gmra.mrb[0].mxu0 %v238
        %v423 = vpop.f32.mrb[0].mxu0
        %v424 = vadd.f32 0.0, %v423
        %v425 = vpop.f32.mrb[0].mxu0
        %426 = vmatprep.mubr.f32.mxu0 0.0
        %427 = vmatmul.mubr.f32.gmra.mrb[0].mxu0 %v241
        %v428 = vpop.f32.mrb[0].mxu0
        %v429 = vadd.f32 0.0, %v428
        %v430 = vpop.f32.mrb[0].mxu0
        %431 = vmatprep.mubr.f32.mxu0 0.0
        %432 = vmatmul.mubr.f32.gmra.mrb[0].mxu0 %v244
        %v433 = vpop.f32.mrb[0].mxu0
        %v434 = vadd.f32 0.0, %v433
        %v435 = vpop.f32.mrb[0].mxu0
        %436 = vmatprep.mubr.f32.mxu0 0.0
        %437 = vmatmul.mubr.f32.gmra.mrb[0].mxu0 %v247
        %v438 = vpop.f32.mrb[0].mxu0
        %v439 = vadd.f32 0.0, %v438
        %v440 = vpop.f32.mrb[0].mxu0
        %441 = vmatprep.mubr.f32.mxu0 0.0
        %442 = vmatmul.mubr.f32.gmra.mrb[0].mxu0 %v250
        %v443 = vpop.f32.mrb[0].mxu0
        %v444 = vadd.f32 0.0, %v443
        %v445 = vpop.f32.mrb[0].mxu0
        %446 = vmatprep.mubr.f32.mxu0 0.0
        %447 = vmatmul.mubr.f32.gmra.mrb[0].mxu0 %v253
        %v448 = vpop.f32.mrb[0].mxu0
        %v449 = vadd.f32 0.0, %v448
        %v450 = vpop.f32.mrb[0].mxu0
        %451 = vmatprep.mubr.f32.mxu0 0.0
        %452 = vmatmul.mubr.f32.gmra.mrb[0].mxu0 %v256
        %v453 = vpop.f32.mrb[0].mxu0
        %v454 = vadd.f32 0.0, %v453
        %v455 = vpop.f32.mrb[0].mxu0
        %456 = vmatprep.mubr.f32.mxu0 0.0
        %457 = vmatmul.mubr.f32.gmra.mrb[0].mxu0 %v259
        %v458 = vpop.f32.mrb[0].mxu0
        %v459 = vadd.f32 0.0, %v458
        %v460 = vpop.f32.mrb[0].mxu0
        %461 = vmatprep.mubr.f32.mxu0 0.0
        %462 = vmatmul.mubr.f32.gmra.mrb[0].mxu0 %v262
        %v463 = vpop.f32.mrb[0].mxu0
        %v464 = vadd.f32 0.0, %v463
        %v465 = vpop.f32.mrb[0].mxu0
        %466 = vmatprep.mubr.f32.mxu0 0.0
        %467 = vmatmul.mubr.f32.gmra.mrb[0].mxu0 %v265
        %v468 = vpop.f32.mrb[0].mxu0
        %v469 = vadd.f32 0.0, %v468
        %v470 = vpop.f32.mrb[0].mxu0
        %471 = vmatprep.mubr.f32.mxu0 0.0
        %472 = vmatmul.mubr.f32.gmra.mrb[0].mxu0 %v268
        %v473 = vpop.f32.mrb[0].mxu0
        %v474 = vadd.f32 0.0, %v473
        %v475 = vpop.f32.mrb[0].mxu0
        %476 = vmatprep.mubr.f32.mxu0 0.0
        %477 = vmatmul.mubr.f32.gmra.mrb[0].mxu0 %v271
        %v478 = vpop.f32.mrb[0].mxu0
        %v479 = vadd.f32 0.0, %v478
        %v480 = vpop.f32.mrb[0].mxu0
        %481 = vmatprep.mubr.f32.mxu0 0.0
        %482 = vmatmul.mubr.f32.gmra.mrb[0].mxu0 %v274
        %v483 = vpop.f32.mrb[0].mxu0
        %v484 = vadd.f32 0.0, %v483
        %v485 = vpop.f32.mrb[0].mxu0
        %486 = vmatprep.mubr.f32.mxu0 0.0
        %487 = vmatmul.mubr.f32.gmra.mrb[0].mxu0 %v277
        %v488 = vpop.f32.mrb[0].mxu0
        %v489 = vadd.f32 0.0, %v488
        %v490 = vpop.f32.mrb[0].mxu0
        %491 = vmatprep.mubr.f32.mxu0 0.0
        %492 = vmatmul.mubr.f32.gmra.mrb[0].mxu0 %v280
        %v493 = vpop.f32.mrb[0].mxu0
        %v494 = vadd.f32 0.0, %v493
        %v495 = vpop.f32.mrb[0].mxu0
        %496 = vmatprep.mubr.f32.mxu0 0.0
        %497 = vmatmul.mubr.f32.gmra.mrb[0].mxu0 %v283
        %v498 = vpop.f32.mrb[0].mxu0
        %v499 = vadd.f32 0.0, %v498
        %v500 = vpop.f32.mrb[0].mxu0
        %501 = vmatprep.mubr.f32.mxu0 0.0
        %502 = vmatmul.mubr.f32.gmra.mrb[0].mxu0 %v286
        %v503 = vpop.f32.mrb[0].mxu0
        %v504 = vadd.f32 0.0, %v503
        %v505 = vpop.f32.mrb[0].mxu0
        %506 = vmatprep.mubr.f32.mxu0 0.0
        %507 = vmatmul.mubr.f32.gmra.mrb[0].mxu0 %v289
        %v508 = vpop.f32.mrb[0].mxu0
        %v509 = vadd.f32 0.0, %v508
        %v510 = vpop.f32.mrb[0].mxu0
        %511 = vmatprep.mubr.f32.mxu0 0.0
        %512 = vmatmul.mubr.f32.gmra.mrb[0].mxu0 %v292
        %v513 = vpop.f32.mrb[0].mxu0
        %v514 = vadd.f32 0.0, %v513
        %v515 = vpop.f32.mrb[0].mxu0
        %516 = vmatprep.mubr.f32.mxu0 0.0
        %517 = vmatmul.mubr.f32.gmra.mrb[0].mxu0 %v295
        %v518 = vpop.f32.mrb[0].mxu0
        %v519 = vadd.f32 0.0, %v518
        %v520 = vpop.f32.mrb[0].mxu0
        %521 = vmatprep.mubr.f32.mxu0 0.0
        %522 = vmatmul.mubr.f32.gmra.mrb[0].mxu0 %v298
        %v523 = vpop.f32.mrb[0].mxu0
        %v524 = vadd.f32 0.0, %v523
        %v525 = vpop.f32.mrb[0].mxu0
        %526 = vmatprep.mubr.f32.mxu0 0.0
        %527 = vmatmul.mubr.f32.gmra.mrb[0].mxu0 %v301
        %v528 = vpop.f32.mrb[0].mxu0
        %v529 = vadd.f32 0.0, %v528
        %v530 = vpop.f32.mrb[0].mxu0
        %531 = vdwg.mxu0
        %v532 = vmul.f32 %v374, 4.0
        %v533 = vmul.f32 %v379, 4.0
        %v534 = vmul.f32 %v384, 4.0
        %v535 = vmul.f32 %v389, 4.0
        %v536 = vmul.f32 %v394, 4.0
        %v537 = vmul.f32 %v399, 4.0
        %v538 = vmul.f32 %v404, 4.0
        %v539 = vmul.f32 %v409, 4.0
        %v540 = vmul.f32 %v414, 4.0
        %v541 = vmul.f32 %v419, 4.0
        %v542 = vmul.f32 %v424, 4.0
        %v543 = vmul.f32 %v429, 4.0
        %v544 = vmul.f32 %v434, 4.0
        %v545 = vmul.f32 %v439, 4.0
        %v546 = vmul.f32 %v444, 4.0
        %v547 = vmul.f32 %v449, 4.0
        %v548 = vmul.f32 %v454, 4.0
        %v549 = vmul.f32 %v459, 4.0
        %v550 = vmul.f32 %v464, 4.0
        %v551 = vmul.f32 %v469, 4.0
        %v552 = vmul.f32 %v474, 4.0
        %v553 = vmul.f32 %v479, 4.0
        %v554 = vmul.f32 %v484, 4.0
        %v555 = vmul.f32 %v489, 4.0
        %v556 = vmul.f32 %v494, 4.0
        %v557 = vmul.f32 %v499, 4.0
        %v558 = vmul.f32 %v504, 4.0
        %v559 = vmul.f32 %v509, 4.0
        %v560 = vmul.f32 %v514, 4.0
        %v561 = vmul.f32 %v519, 4.0
        %v562 = vmul.f32 %v524, 4.0
        %v563 = vmul.f32 %v529, 4.0
        %v564 = vround.ne.pseudo %v532
        %v565 = vround.ne.pseudo %v533
        %v566 = vround.ne.pseudo %v534
        %v567 = vround.ne.pseudo %v535
        %v568 = vround.ne.pseudo %v536
        %v569 = vround.ne.pseudo %v537
        %v570 = vround.ne.pseudo %v538
        %v571 = vround.ne.pseudo %v539
        %v572 = vround.ne.pseudo %v540
        %v573 = vround.ne.pseudo %v541
        %v574 = vround.ne.pseudo %v542
        %v575 = vround.ne.pseudo %v543
        %v576 = vround.ne.pseudo %v544
        %v577 = vround.ne.pseudo %v545
        %v578 = vround.ne.pseudo %v546
        %v579 = vround.ne.pseudo %v547
        %v580 = vround.ne.pseudo %v548
        %v581 = vround.ne.pseudo %v549
        %v582 = vround.ne.pseudo %v550
        %v583 = vround.ne.pseudo %v551
        %v584 = vround.ne.pseudo %v552
        %v585 = vround.ne.pseudo %v553
        %v586 = vround.ne.pseudo %v554
        %v587 = vround.ne.pseudo %v555
        %v588 = vround.ne.pseudo %v556
        %v589 = vround.ne.pseudo %v557
        %v590 = vround.ne.pseudo %v558
        %v591 = vround.ne.pseudo %v559
        %v592 = vround.ne.pseudo %v560
        %v593 = vround.ne.pseudo %v561
        %v594 = vround.ne.pseudo %v562
        %v595 = vround.ne.pseudo %v563
        %v596 = vmul.f32 %v564, 0.25
        %v597 = vmul.f32 %v565, 0.25
        %v598 = vmul.f32 %v566, 0.25
        %v599 = vmul.f32 %v567, 0.25
        %v600 = vmul.f32 %v568, 0.25
        %v601 = vmul.f32 %v569, 0.25
        %v602 = vmul.f32 %v570, 0.25
        %v603 = vmul.f32 %v571, 0.25
        %v604 = vmul.f32 %v572, 0.25
        %v605 = vmul.f32 %v573, 0.25
        %v606 = vmul.f32 %v574, 0.25
        %v607 = vmul.f32 %v575, 0.25
        %v608 = vmul.f32 %v576, 0.25
        %v609 = vmul.f32 %v577, 0.25
        %v610 = vmul.f32 %v578, 0.25
        %v611 = vmul.f32 %v579, 0.25
        %v612 = vmul.f32 %v580, 0.25
        %v613 = vmul.f32 %v581, 0.25
        %v614 = vmul.f32 %v582, 0.25
        %v615 = vmul.f32 %v583, 0.25
        %v616 = vmul.f32 %v584, 0.25
        %v617 = vmul.f32 %v585, 0.25
        %v618 = vmul.f32 %v586, 0.25
        %v619 = vmul.f32 %v587, 0.25
        %v620 = vmul.f32 %v588, 0.25
        %v621 = vmul.f32 %v589, 0.25
        %v622 = vmul.f32 %v590, 0.25
        %v623 = vmul.f32 %v591, 0.25
        %v624 = vmul.f32 %v592, 0.25
        %v625 = vmul.f32 %v593, 0.25
        %v626 = vmul.f32 %v594, 0.25
        %v627 = vmul.f32 %v595, 0.25
        %v628 = vsub.f32 %v374, %v596
        %v629 = vsub.f32 %v379, %v597
        %v630 = vsub.f32 %v384, %v598
        %v631 = vsub.f32 %v389, %v599
        %v632 = vsub.f32 %v394, %v600
        %v633 = vsub.f32 %v399, %v601
        %v634 = vsub.f32 %v404, %v602
        %v635 = vsub.f32 %v409, %v603
        %v636 = vsub.f32 %v414, %v604
        %v637 = vsub.f32 %v419, %v605
        %v638 = vsub.f32 %v424, %v606
        %v639 = vsub.f32 %v429, %v607
        %v640 = vsub.f32 %v434, %v608
        %v641 = vsub.f32 %v439, %v609
        %v642 = vsub.f32 %v444, %v610
        %v643 = vsub.f32 %v449, %v611
        %v644 = vsub.f32 %v454, %v612
        %v645 = vsub.f32 %v459, %v613
        %v646 = vsub.f32 %v464, %v614
        %v647 = vsub.f32 %v469, %v615
        %v648 = vsub.f32 %v474, %v616
        %v649 = vsub.f32 %v479, %v617
        %v650 = vsub.f32 %v484, %v618
        %v651 = vsub.f32 %v489, %v619
        %v652 = vsub.f32 %v494, %v620
        %v653 = vsub.f32 %v499, %v621
        %v654 = vsub.f32 %v504, %v622
        %v655 = vsub.f32 %v509, %v623
        %v656 = vsub.f32 %v514, %v624
        %v657 = vsub.f32 %v519, %v625
        %v658 = vsub.f32 %v524, %v626
        %v659 = vsub.f32 %v529, %v627
        %v660 = vmul.f32 %v628, 6.2831855
        %v661 = vmul.f32 %v629, 6.2831855
        %v662 = vmul.f32 %v630, 6.2831855
        %v663 = vmul.f32 %v631, 6.2831855
        %v664 = vmul.f32 %v632, 6.2831855
        %v665 = vmul.f32 %v633, 6.2831855
        %v666 = vmul.f32 %v634, 6.2831855
        %v667 = vmul.f32 %v635, 6.2831855
        %v668 = vmul.f32 %v636, 6.2831855
        %v669 = vmul.f32 %v637, 6.2831855
        %v670 = vmul.f32 %v638, 6.2831855
        %v671 = vmul.f32 %v639, 6.2831855
        %v672 = vmul.f32 %v640, 6.2831855
        %v673 = vmul.f32 %v641, 6.2831855
        %v674 = vmul.f32 %v642, 6.2831855
        %v675 = vmul.f32 %v643, 6.2831855
        %v676 = vmul.f32 %v644, 6.2831855
        %v677 = vmul.f32 %v645, 6.2831855
        %v678 = vmul.f32 %v646, 6.2831855
        %v679 = vmul.f32 %v647, 6.2831855
        %v680 = vmul.f32 %v648, 6.2831855
        %v681 = vmul.f32 %v649, 6.2831855
        %v682 = vmul.f32 %v650, 6.2831855
        %v683 = vmul.f32 %v651, 6.2831855
        %v684 = vmul.f32 %v652, 6.2831855
        %v685 = vmul.f32 %v653, 6.2831855
        %v686 = vmul.f32 %v654, 6.2831855
        %v687 = vmul.f32 %v655, 6.2831855
        %v688 = vmul.f32 %v656, 6.2831855
        %v689 = vmul.f32 %v657, 6.2831855
        %v690 = vmul.f32 %v658, 6.2831855
        %v691 = vmul.f32 %v659, 6.2831855
        %v692 = vmul.f32 %v660, %v660
        %v693 = vmul.f32 %v661, %v661
        %v694 = vmul.f32 %v662, %v662
        %v695 = vmul.f32 %v663, %v663
        %v696 = vmul.f32 %v664, %v664
        %v697 = vmul.f32 %v665, %v665
        %v698 = vmul.f32 %v666, %v666
        %v699 = vmul.f32 %v667, %v667
        %v700 = vmul.f32 %v668, %v668
        %v701 = vmul.f32 %v669, %v669
        %v702 = vmul.f32 %v670, %v670
        %v703 = vmul.f32 %v671, %v671
        %v704 = vmul.f32 %v672, %v672
        %v705 = vmul.f32 %v673, %v673
        %v706 = vmul.f32 %v674, %v674
        %v707 = vmul.f32 %v675, %v675
        %v708 = vmul.f32 %v676, %v676
        %v709 = vmul.f32 %v677, %v677
        %v710 = vmul.f32 %v678, %v678
        %v711 = vmul.f32 %v679, %v679
        %v712 = vmul.f32 %v680, %v680
        %v713 = vmul.f32 %v681, %v681
        %v714 = vmul.f32 %v682, %v682
        %v715 = vmul.f32 %v683, %v683
        %v716 = vmul.f32 %v684, %v684
        %v717 = vmul.f32 %v685, %v685
        %v718 = vmul.f32 %v686, %v686
        %v719 = vmul.f32 %v687, %v687
        %v720 = vmul.f32 %v688, %v688
        %v721 = vmul.f32 %v689, %v689
        %v722 = vmul.f32 %v690, %v690
        %v723 = vmul.f32 %v691, %v691
        %v724 = vmul.f32 %v692, -0.0001984127
        %v725 = vmul.f32 %v693, -0.0001984127
        %v726 = vmul.f32 %v694, -0.0001984127
        %v727 = vmul.f32 %v695, -0.0001984127
        %v728 = vmul.f32 %v696, -0.0001984127
        %v729 = vmul.f32 %v697, -0.0001984127
        %v730 = vmul.f32 %v698, -0.0001984127
        %v731 = vmul.f32 %v699, -0.0001984127
        %v732 = vmul.f32 %v700, -0.0001984127
        %v733 = vmul.f32 %v701, -0.0001984127
        %v734 = vmul.f32 %v702, -0.0001984127
        %v735 = vmul.f32 %v703, -0.0001984127
        %v736 = vmul.f32 %v704, -0.0001984127
        %v737 = vmul.f32 %v705, -0.0001984127
        %v738 = vmul.f32 %v706, -0.0001984127
        %v739 = vmul.f32 %v707, -0.0001984127
        %v740 = vmul.f32 %v708, -0.0001984127
        %v741 = vmul.f32 %v709, -0.0001984127
        %v742 = vmul.f32 %v710, -0.0001984127
        %v743 = vmul.f32 %v711, -0.0001984127
        %v744 = vmul.f32 %v712, -0.0001984127
        %v745 = vmul.f32 %v713, -0.0001984127
        %v746 = vmul.f32 %v714, -0.0001984127
        %v747 = vmul.f32 %v715, -0.0001984127
        %v748 = vmul.f32 %v716, -0.0001984127
        %v749 = vmul.f32 %v717, -0.0001984127
        %v750 = vmul.f32 %v718, -0.0001984127
        %v751 = vmul.f32 %v719, -0.0001984127
        %v752 = vmul.f32 %v720, -0.0001984127
        %v753 = vmul.f32 %v721, -0.0001984127
        %v754 = vmul.f32 %v722, -0.0001984127
        %v755 = vmul.f32 %v723, -0.0001984127
        %v756 = vadd.f32 %v724, 0.008333334
        %v757 = vadd.f32 %v725, 0.008333334
        %v758 = vadd.f32 %v726, 0.008333334
        %v759 = vadd.f32 %v727, 0.008333334
        %v760 = vadd.f32 %v728, 0.008333334
        %v761 = vadd.f32 %v729, 0.008333334
        %v762 = vadd.f32 %v730, 0.008333334
        %v763 = vadd.f32 %v731, 0.008333334
        %v764 = vadd.f32 %v732, 0.008333334
        %v765 = vadd.f32 %v733, 0.008333334
        %v766 = vadd.f32 %v734, 0.008333334
        %v767 = vadd.f32 %v735, 0.008333334
        %v768 = vadd.f32 %v736, 0.008333334
        %v769 = vadd.f32 %v737, 0.008333334
        %v770 = vadd.f32 %v738, 0.008333334
        %v771 = vadd.f32 %v739, 0.008333334
        %v772 = vadd.f32 %v740, 0.008333334
        %v773 = vadd.f32 %v741, 0.008333334
        %v774 = vadd.f32 %v742, 0.008333334
        %v775 = vadd.f32 %v743, 0.008333334
        %v776 = vadd.f32 %v744, 0.008333334
        %v777 = vadd.f32 %v745, 0.008333334
        %v778 = vadd.f32 %v746, 0.008333334
        %v779 = vadd.f32 %v747, 0.008333334
        %v780 = vadd.f32 %v748, 0.008333334
        %v781 = vadd.f32 %v749, 0.008333334
        %v782 = vadd.f32 %v750, 0.008333334
        %v783 = vadd.f32 %v751, 0.008333334
        %v784 = vadd.f32 %v752, 0.008333334
        %v785 = vadd.f32 %v753, 0.008333334
        %v786 = vadd.f32 %v754, 0.008333334
        %v787 = vadd.f32 %v755, 0.008333334
        %v788 = vmul.f32 %v692, %v756
        %v789 = vmul.f32 %v693, %v757
        %v790 = vmul.f32 %v694, %v758
        %v791 = vmul.f32 %v695, %v759
        %v792 = vmul.f32 %v696, %v760
        %v793 = vmul.f32 %v697, %v761
        %v794 = vmul.f32 %v698, %v762
        %v795 = vmul.f32 %v699, %v763
        %v796 = vmul.f32 %v700, %v764
        %v797 = vmul.f32 %v701, %v765
        %v798 = vmul.f32 %v702, %v766
        %v799 = vmul.f32 %v703, %v767
        %v800 = vmul.f32 %v704, %v768
        %v801 = vmul.f32 %v705, %v769
        %v802 = vmul.f32 %v706, %v770
        %v803 = vmul.f32 %v707, %v771
        %v804 = vmul.f32 %v708, %v772
        %v805 = vmul.f32 %v709, %v773
        %v806 = vmul.f32 %v710, %v774
        %v807 = vmul.f32 %v711, %v775
        %v808 = vmul.f32 %v712, %v776
        %v809 = vmul.f32 %v713, %v777
        %v810 = vmul.f32 %v714, %v778
        %v811 = vmul.f32 %v715, %v779
        %v812 = vmul.f32 %v716, %v780
        %v813 = vmul.f32 %v717, %v781
        %v814 = vmul.f32 %v718, %v782
        %v815 = vmul.f32 %v719, %v783
        %v816 = vmul.f32 %v720, %v784
        %v817 = vmul.f32 %v721, %v785
        %v818 = vmul.f32 %v722, %v786
        %v819 = vmul.f32 %v723, %v787
        %v820 = vadd.f32 %v788, -0.16666667
        %v821 = vadd.f32 %v789, -0.16666667
        %v822 = vadd.f32 %v790, -0.16666667
        %v823 = vadd.f32 %v791, -0.16666667
        %v824 = vadd.f32 %v792, -0.16666667
        %v825 = vadd.f32 %v793, -0.16666667
        %v826 = vadd.f32 %v794, -0.16666667
        %v827 = vadd.f32 %v795, -0.16666667
        %v828 = vadd.f32 %v796, -0.16666667
        %v829 = vadd.f32 %v797, -0.16666667
        %v830 = vadd.f32 %v798, -0.16666667
        %v831 = vadd.f32 %v799, -0.16666667
        %v832 = vadd.f32 %v800, -0.16666667
        %v833 = vadd.f32 %v801, -0.16666667
        %v834 = vadd.f32 %v802, -0.16666667
        %v835 = vadd.f32 %v803, -0.16666667
        %v836 = vadd.f32 %v804, -0.16666667
        %v837 = vadd.f32 %v805, -0.16666667
        %v838 = vadd.f32 %v806, -0.16666667
        %v839 = vadd.f32 %v807, -0.16666667
        %v840 = vadd.f32 %v808, -0.16666667
        %v841 = vadd.f32 %v809, -0.16666667
        %v842 = vadd.f32 %v810, -0.16666667
        %v843 = vadd.f32 %v811, -0.16666667
        %v844 = vadd.f32 %v812, -0.16666667
        %v845 = vadd.f32 %v813, -0.16666667
        %v846 = vadd.f32 %v814, -0.16666667
        %v847 = vadd.f32 %v815, -0.16666667
        %v848 = vadd.f32 %v816, -0.16666667
        %v849 = vadd.f32 %v817, -0.16666667
        %v850 = vadd.f32 %v818, -0.16666667
        %v851 = vadd.f32 %v819, -0.16666667
        %v852 = vmul.f32 %v692, %v820
        %v853 = vmul.f32 %v693, %v821
        %v854 = vmul.f32 %v694, %v822
        %v855 = vmul.f32 %v695, %v823
        %v856 = vmul.f32 %v696, %v824
        %v857 = vmul.f32 %v697, %v825
        %v858 = vmul.f32 %v698, %v826
        %v859 = vmul.f32 %v699, %v827
        %v860 = vmul.f32 %v700, %v828
        %v861 = vmul.f32 %v701, %v829
        %v862 = vmul.f32 %v702, %v830
        %v863 = vmul.f32 %v703, %v831
        %v864 = vmul.f32 %v704, %v832
        %v865 = vmul.f32 %v705, %v833
        %v866 = vmul.f32 %v706, %v834
        %v867 = vmul.f32 %v707, %v835
        %v868 = vmul.f32 %v708, %v836
        %v869 = vmul.f32 %v709, %v837
        %v870 = vmul.f32 %v710, %v838
        %v871 = vmul.f32 %v711, %v839
        %v872 = vmul.f32 %v712, %v840
        %v873 = vmul.f32 %v713, %v841
        %v874 = vmul.f32 %v714, %v842
        %v875 = vmul.f32 %v715, %v843
        %v876 = vmul.f32 %v716, %v844
        %v877 = vmul.f32 %v717, %v845
        %v878 = vmul.f32 %v718, %v846
        %v879 = vmul.f32 %v719, %v847
        %v880 = vmul.f32 %v720, %v848
        %v881 = vmul.f32 %v721, %v849
        %v882 = vmul.f32 %v722, %v850
        %v883 = vmul.f32 %v723, %v851
        %v884 = vadd.f32 %v852, 1.0
        %v885 = vadd.f32 %v853, 1.0
        %v886 = vadd.f32 %v854, 1.0
        %v887 = vadd.f32 %v855, 1.0
        %v888 = vadd.f32 %v856, 1.0
        %v889 = vadd.f32 %v857, 1.0
        %v890 = vadd.f32 %v858, 1.0
        %v891 = vadd.f32 %v859, 1.0
        %v892 = vadd.f32 %v860, 1.0
        %v893 = vadd.f32 %v861, 1.0
        %v894 = vadd.f32 %v862, 1.0
        %v895 = vadd.f32 %v863, 1.0
        %v896 = vadd.f32 %v864, 1.0
        %v897 = vadd.f32 %v865, 1.0
        %v898 = vadd.f32 %v866, 1.0
        %v899 = vadd.f32 %v867, 1.0
        %v900 = vadd.f32 %v868, 1.0
        %v901 = vadd.f32 %v869, 1.0
        %v902 = vadd.f32 %v870, 1.0
        %v903 = vadd.f32 %v871, 1.0
        %v904 = vadd.f32 %v872, 1.0
        %v905 = vadd.f32 %v873, 1.0
        %v906 = vadd.f32 %v874, 1.0
        %v907 = vadd.f32 %v875, 1.0
        %v908 = vadd.f32 %v876, 1.0
        %v909 = vadd.f32 %v877, 1.0
        %v910 = vadd.f32 %v878, 1.0
        %v911 = vadd.f32 %v879, 1.0
        %v912 = vadd.f32 %v880, 1.0
        %v913 = vadd.f32 %v881, 1.0
        %v914 = vadd.f32 %v882, 1.0
        %v915 = vadd.f32 %v883, 1.0
        %v916 = vmul.f32 %v660, %v884
        %v917 = vmul.f32 %v661, %v885
        %v918 = vmul.f32 %v662, %v886
        %v919 = vmul.f32 %v663, %v887
        %v920 = vmul.f32 %v664, %v888
        %v921 = vmul.f32 %v665, %v889
        %v922 = vmul.f32 %v666, %v890
        %v923 = vmul.f32 %v667, %v891
        %v924 = vmul.f32 %v668, %v892
        %v925 = vmul.f32 %v669, %v893
        %v926 = vmul.f32 %v670, %v894
        %v927 = vmul.f32 %v671, %v895
        %v928 = vmul.f32 %v672, %v896
        %v929 = vmul.f32 %v673, %v897
        %v930 = vmul.f32 %v674, %v898
        %v931 = vmul.f32 %v675, %v899
        %v932 = vmul.f32 %v676, %v900
        %v933 = vmul.f32 %v677, %v901
        %v934 = vmul.f32 %v678, %v902
        %v935 = vmul.f32 %v679, %v903
        %v936 = vmul.f32 %v680, %v904
        %v937 = vmul.f32 %v681, %v905
        %v938 = vmul.f32 %v682, %v906
        %v939 = vmul.f32 %v683, %v907
        %v940 = vmul.f32 %v684, %v908
        %v941 = vmul.f32 %v685, %v909
        %v942 = vmul.f32 %v686, %v910
        %v943 = vmul.f32 %v687, %v911
        %v944 = vmul.f32 %v688, %v912
        %v945 = vmul.f32 %v689, %v913
        %v946 = vmul.f32 %v690, %v914
        %v947 = vmul.f32 %v691, %v915
        %v948 = vmul.f32 %v692, 2.4801588e-05
        %v949 = vmul.f32 %v693, 2.4801588e-05
        %v950 = vmul.f32 %v694, 2.4801588e-05
        %v951 = vmul.f32 %v695, 2.4801588e-05
        %v952 = vmul.f32 %v696, 2.4801588e-05
        %v953 = vmul.f32 %v697, 2.4801588e-05
        %v954 = vmul.f32 %v698, 2.4801588e-05
        %v955 = vmul.f32 %v699, 2.4801588e-05
        %v956 = vmul.f32 %v700, 2.4801588e-05
        %v957 = vmul.f32 %v701, 2.4801588e-05
        %v958 = vmul.f32 %v702, 2.4801588e-05
        %v959 = vmul.f32 %v703, 2.4801588e-05
        %v960 = vmul.f32 %v704, 2.4801588e-05
        %v961 = vmul.f32 %v705, 2.4801588e-05
        %v962 = vmul.f32 %v706, 2.4801588e-05
        %v963 = vmul.f32 %v707, 2.4801588e-05
        %v964 = vmul.f32 %v708, 2.4801588e-05
        %v965 = vmul.f32 %v709, 2.4801588e-05
        %v966 = vmul.f32 %v710, 2.4801588e-05
        %v967 = vmul.f32 %v711, 2.4801588e-05
        %v968 = vmul.f32 %v712, 2.4801588e-05
        %v969 = vmul.f32 %v713, 2.4801588e-05
        %v970 = vmul.f32 %v714, 2.4801588e-05
        %v971 = vmul.f32 %v715, 2.4801588e-05
        %v972 = vmul.f32 %v716, 2.4801588e-05
        %v973 = vmul.f32 %v717, 2.4801588e-05
        %v974 = vmul.f32 %v718, 2.4801588e-05
        %v975 = vmul.f32 %v719, 2.4801588e-05
        %v976 = vmul.f32 %v720, 2.4801588e-05
        %v977 = vmul.f32 %v721, 2.4801588e-05
        %v978 = vmul.f32 %v722, 2.4801588e-05
        %v979 = vmul.f32 %v723, 2.4801588e-05
        %v980 = vadd.f32 %v948, -0.0013888889
        %v981 = vadd.f32 %v949, -0.0013888889
        %v982 = vadd.f32 %v950, -0.0013888889
        %v983 = vadd.f32 %v951, -0.0013888889
        %v984 = vadd.f32 %v952, -0.0013888889
        %v985 = vadd.f32 %v953, -0.0013888889
        %v986 = vadd.f32 %v954, -0.0013888889
        %v987 = vadd.f32 %v955, -0.0013888889
        %v988 = vadd.f32 %v956, -0.0013888889
        %v989 = vadd.f32 %v957, -0.0013888889
        %v990 = vadd.f32 %v958, -0.0013888889
        %v991 = vadd.f32 %v959, -0.0013888889
        %v992 = vadd.f32 %v960, -0.0013888889
        %v993 = vadd.f32 %v961, -0.0013888889
        %v994 = vadd.f32 %v962, -0.0013888889
        %v995 = vadd.f32 %v963, -0.0013888889
        %v996 = vadd.f32 %v964, -0.0013888889
        %v997 = vadd.f32 %v965, -0.0013888889
        %v998 = vadd.f32 %v966, -0.0013888889
        %v999 = vadd.f32 %v967, -0.0013888889
        %v1000 = vadd.f32 %v968, -0.0013888889
        %v1001 = vadd.f32 %v969, -0.0013888889
        %v1002 = vadd.f32 %v970, -0.0013888889
        %v1003 = vadd.f32 %v971, -0.0013888889
        %v1004 = vadd.f32 %v972, -0.0013888889
        %v1005 = vadd.f32 %v973, -0.0013888889
        %v1006 = vadd.f32 %v974, -0.0013888889
        %v1007 = vadd.f32 %v975, -0.0013888889
        %v1008 = vadd.f32 %v976, -0.0013888889
        %v1009 = vadd.f32 %v977, -0.0013888889
        %v1010 = vadd.f32 %v978, -0.0013888889
        %v1011 = vadd.f32 %v979, -0.0013888889
        %v1012 = vmul.f32 %v692, %v980
        %v1013 = vmul.f32 %v693, %v981
        %v1014 = vmul.f32 %v694, %v982
        %v1015 = vmul.f32 %v695, %v983
        %v1016 = vmul.f32 %v696, %v984
        %v1017 = vmul.f32 %v697, %v985
        %v1018 = vmul.f32 %v698, %v986
        %v1019 = vmul.f32 %v699, %v987
        %v1020 = vmul.f32 %v700, %v988
        %v1021 = vmul.f32 %v701, %v989
        %v1022 = vmul.f32 %v702, %v990
        %v1023 = vmul.f32 %v703, %v991
        %v1024 = vmul.f32 %v704, %v992
        %v1025 = vmul.f32 %v705, %v993
        %v1026 = vmul.f32 %v706, %v994
        %v1027 = vmul.f32 %v707, %v995
        %v1028 = vmul.f32 %v708, %v996
        %v1029 = vmul.f32 %v709, %v997
        %v1030 = vmul.f32 %v710, %v998
        %v1031 = vmul.f32 %v711, %v999
        %v1032 = vmul.f32 %v712, %v1000
        %v1033 = vmul.f32 %v713, %v1001
        %v1034 = vmul.f32 %v714, %v1002
        %v1035 = vmul.f32 %v715, %v1003
        %v1036 = vmul.f32 %v716, %v1004
        %v1037 = vmul.f32 %v717, %v1005
        %v1038 = vmul.f32 %v718, %v1006
        %v1039 = vmul.f32 %v719, %v1007
        %v1040 = vmul.f32 %v720, %v1008
        %v1041 = vmul.f32 %v721, %v1009
        %v1042 = vmul.f32 %v722, %v1010
        %v1043 = vmul.f32 %v723, %v1011
        %v1044 = vadd.f32 %v1012, 0.041666668
        %v1045 = vadd.f32 %v1013, 0.041666668
        %v1046 = vadd.f32 %v1014, 0.041666668
        %v1047 = vadd.f32 %v1015, 0.041666668
        %v1048 = vadd.f32 %v1016, 0.041666668
        %v1049 = vadd.f32 %v1017, 0.041666668
        %v1050 = vadd.f32 %v1018, 0.041666668
        %v1051 = vadd.f32 %v1019, 0.041666668
        %v1052 = vadd.f32 %v1020, 0.041666668
        %v1053 = vadd.f32 %v1021, 0.041666668
        %v1054 = vadd.f32 %v1022, 0.041666668
        %v1055 = vadd.f32 %v1023, 0.041666668
        %v1056 = vadd.f32 %v1024, 0.041666668
        %v1057 = vadd.f32 %v1025, 0.041666668
        %v1058 = vadd.f32 %v1026, 0.041666668
        %v1059 = vadd.f32 %v1027, 0.041666668
        %v1060 = vadd.f32 %v1028, 0.041666668
        %v1061 = vadd.f32 %v1029, 0.041666668
        %v1062 = vadd.f32 %v1030, 0.041666668
        %v1063 = vadd.f32 %v1031, 0.041666668
        %v1064 = vadd.f32 %v1032, 0.041666668
        %v1065 = vadd.f32 %v1033, 0.041666668
        %v1066 = vadd.f32 %v1034, 0.041666668
        %v1067 = vadd.f32 %v1035, 0.041666668
        %v1068 = vadd.f32 %v1036, 0.041666668
        %v1069 = vadd.f32 %v1037, 0.041666668
        %v1070 = vadd.f32 %v1038, 0.041666668
        %v1071 = vadd.f32 %v1039, 0.041666668
        %v1072 = vadd.f32 %v1040, 0.041666668
        %v1073 = vadd.f32 %v1041, 0.041666668
        %v1074 = vadd.f32 %v1042, 0.041666668
        %v1075 = vadd.f32 %v1043, 0.041666668
        %v1076 = vmul.f32 %v692, %v1044
        %v1077 = vmul.f32 %v693, %v1045
        %v1078 = vmul.f32 %v694, %v1046
        %v1079 = vmul.f32 %v695, %v1047
        %v1080 = vmul.f32 %v696, %v1048
        %v1081 = vmul.f32 %v697, %v1049
        %v1082 = vmul.f32 %v698, %v1050
        %v1083 = vmul.f32 %v699, %v1051
        %v1084 = vmul.f32 %v700, %v1052
        %v1085 = vmul.f32 %v701, %v1053
        %v1086 = vmul.f32 %v702, %v1054
        %v1087 = vmul.f32 %v703, %v1055
        %v1088 = vmul.f32 %v704, %v1056
        %v1089 = vmul.f32 %v705, %v1057
        %v1090 = vmul.f32 %v706, %v1058
        %v1091 = vmul.f32 %v707, %v1059
        %v1092 = vmul.f32 %v708, %v1060
        %v1093 = vmul.f32 %v709, %v1061
        %v1094 = vmul.f32 %v710, %v1062
        %v1095 = vmul.f32 %v711, %v1063
        %v1096 = vmul.f32 %v712, %v1064
        %v1097 = vmul.f32 %v713, %v1065
        %v1098 = vmul.f32 %v714, %v1066
        %v1099 = vmul.f32 %v715, %v1067
        %v1100 = vmul.f32 %v716, %v1068
        %v1101 = vmul.f32 %v717, %v1069
        %v1102 = vmul.f32 %v718, %v1070
        %v1103 = vmul.f32 %v719, %v1071
        %v1104 = vmul.f32 %v720, %v1072
        %v1105 = vmul.f32 %v721, %v1073
        %v1106 = vmul.f32 %v722, %v1074
        %v1107 = vmul.f32 %v723, %v1075
        %v1108 = vadd.f32 %v1076, -0.5
        %v1109 = vadd.f32 %v1077, -0.5
        %v1110 = vadd.f32 %v1078, -0.5
        %v1111 = vadd.f32 %v1079, -0.5
        %v1112 = vadd.f32 %v1080, -0.5
        %v1113 = vadd.f32 %v1081, -0.5
        %v1114 = vadd.f32 %v1082, -0.5
        %v1115 = vadd.f32 %v1083, -0.5
        %v1116 = vadd.f32 %v1084, -0.5
        %v1117 = vadd.f32 %v1085, -0.5
        %v1118 = vadd.f32 %v1086, -0.5
        %v1119 = vadd.f32 %v1087, -0.5
        %v1120 = vadd.f32 %v1088, -0.5
        %v1121 = vadd.f32 %v1089, -0.5
        %v1122 = vadd.f32 %v1090, -0.5
        %v1123 = vadd.f32 %v1091, -0.5
        %v1124 = vadd.f32 %v1092, -0.5
        %v1125 = vadd.f32 %v1093, -0.5
        %v1126 = vadd.f32 %v1094, -0.5
        %v1127 = vadd.f32 %v1095, -0.5
        %v1128 = vadd.f32 %v1096, -0.5
        %v1129 = vadd.f32 %v1097, -0.5
        %v1130 = vadd.f32 %v1098, -0.5
        %v1131 = vadd.f32 %v1099, -0.5
        %v1132 = vadd.f32 %v1100, -0.5
        %v1133 = vadd.f32 %v1101, -0.5
        %v1134 = vadd.f32 %v1102, -0.5
        %v1135 = vadd.f32 %v1103, -0.5
        %v1136 = vadd.f32 %v1104, -0.5
        %v1137 = vadd.f32 %v1105, -0.5
        %v1138 = vadd.f32 %v1106, -0.5
        %v1139 = vadd.f32 %v1107, -0.5
        %v1140 = vmul.f32 %v692, %v1108
        %v1141 = vmul.f32 %v693, %v1109
        %v1142 = vmul.f32 %v694, %v1110
        %v1143 = vmul.f32 %v695, %v1111
        %v1144 = vmul.f32 %v696, %v1112
        %v1145 = vmul.f32 %v697, %v1113
        %v1146 = vmul.f32 %v698, %v1114
        %v1147 = vmul.f32 %v699, %v1115
        %v1148 = vmul.f32 %v700, %v1116
        %v1149 = vmul.f32 %v701, %v1117
        %v1150 = vmul.f32 %v702, %v1118
        %v1151 = vmul.f32 %v703, %v1119
        %v1152 = vmul.f32 %v704, %v1120
        %v1153 = vmul.f32 %v705, %v1121
        %v1154 = vmul.f32 %v706, %v1122
        %v1155 = vmul.f32 %v707, %v1123
        %v1156 = vmul.f32 %v708, %v1124
        %v1157 = vmul.f32 %v709, %v1125
        %v1158 = vmul.f32 %v710, %v1126
        %v1159 = vmul.f32 %v711, %v1127
        %v1160 = vmul.f32 %v712, %v1128
        %v1161 = vmul.f32 %v713, %v1129
        %v1162 = vmul.f32 %v714, %v1130
        %v1163 = vmul.f32 %v715, %v1131
        %v1164 = vmul.f32 %v716, %v1132
        %v1165 = vmul.f32 %v717, %v1133
        %v1166 = vmul.f32 %v718, %v1134
        %v1167 = vmul.f32 %v719, %v1135
        %v1168 = vmul.f32 %v720, %v1136
        %v1169 = vmul.f32 %v721, %v1137
        %v1170 = vmul.f32 %v722, %v1138
        %v1171 = vmul.f32 %v723, %v1139
        %v1172 = vadd.f32 %v1140, 1.0
        %v1173 = vadd.f32 %v1141, 1.0
        %v1174 = vadd.f32 %v1142, 1.0
        %v1175 = vadd.f32 %v1143, 1.0
        %v1176 = vadd.f32 %v1144, 1.0
        %v1177 = vadd.f32 %v1145, 1.0
        %v1178 = vadd.f32 %v1146, 1.0
        %v1179 = vadd.f32 %v1147, 1.0
        %v1180 = vadd.f32 %v1148, 1.0
        %v1181 = vadd.f32 %v1149, 1.0
        %v1182 = vadd.f32 %v1150, 1.0
        %v1183 = vadd.f32 %v1151, 1.0
        %v1184 = vadd.f32 %v1152, 1.0
        %v1185 = vadd.f32 %v1153, 1.0
        %v1186 = vadd.f32 %v1154, 1.0
        %v1187 = vadd.f32 %v1155, 1.0
        %v1188 = vadd.f32 %v1156, 1.0
        %v1189 = vadd.f32 %v1157, 1.0
        %v1190 = vadd.f32 %v1158, 1.0
        %v1191 = vadd.f32 %v1159, 1.0
        %v1192 = vadd.f32 %v1160, 1.0
        %v1193 = vadd.f32 %v1161, 1.0
        %v1194 = vadd.f32 %v1162, 1.0
        %v1195 = vadd.f32 %v1163, 1.0
        %v1196 = vadd.f32 %v1164, 1.0
        %v1197 = vadd.f32 %v1165, 1.0
        %v1198 = vadd.f32 %v1166, 1.0
        %v1199 = vadd.f32 %v1167, 1.0
        %v1200 = vadd.f32 %v1168, 1.0
        %v1201 = vadd.f32 %v1169, 1.0
        %v1202 = vadd.f32 %v1170, 1.0
        %v1203 = vadd.f32 %v1171, 1.0
        %v1204 = vcvt.f32.s32.ties.to.even %v532
        %v1205 = vcvt.f32.s32.ties.to.even %v533
        %v1206 = vcvt.f32.s32.ties.to.even %v534
        %v1207 = vcvt.f32.s32.ties.to.even %v535
        %v1208 = vcvt.f32.s32.ties.to.even %v536
        %v1209 = vcvt.f32.s32.ties.to.even %v537
        %v1210 = vcvt.f32.s32.ties.to.even %v538
        %v1211 = vcvt.f32.s32.ties.to.even %v539
        %v1212 = vcvt.f32.s32.ties.to.even %v540
        %v1213 = vcvt.f32.s32.ties.to.even %v541
        %v1214 = vcvt.f32.s32.ties.to.even %v542
        %v1215 = vcvt.f32.s32.ties.to.even %v543
        %v1216 = vcvt.f32.s32.ties.to.even %v544
        %v1217 = vcvt.f32.s32.ties.to.even %v545
        %v1218 = vcvt.f32.s32.ties.to.even %v546
        %v1219 = vcvt.f32.s32.ties.to.even %v547
        %v1220 = vcvt.f32.s32.ties.to.even %v548
        %v1221 = vcvt.f32.s32.ties.to.even %v549
        %v1222 = vcvt.f32.s32.ties.to.even %v550
        %v1223 = vcvt.f32.s32.ties.to.even %v551
        %v1224 = vcvt.f32.s32.ties.to.even %v552
        %v1225 = vcvt.f32.s32.ties.to.even %v553
        %v1226 = vcvt.f32.s32.ties.to.even %v554
        %v1227 = vcvt.f32.s32.ties.to.even %v555
        %v1228 = vcvt.f32.s32.ties.to.even %v556
        %v1229 = vcvt.f32.s32.ties.to.even %v557
        %v1230 = vcvt.f32.s32.ties.to.even %v558
        %v1231 = vcvt.f32.s32.ties.to.even %v559
        %v1232 = vcvt.f32.s32.ties.to.even %v560
        %v1233 = vcvt.f32.s32.ties.to.even %v561
        %v1234 = vcvt.f32.s32.ties.to.even %v562
        %v1235 = vcvt.f32.s32.ties.to.even %v563
        %v1236 = vand.u32 %v1204, 3
        %v1237 = vand.u32 %v1205, 3
        %v1238 = vand.u32 %v1206, 3
        %v1239 = vand.u32 %v1207, 3
        %v1240 = vand.u32 %v1208, 3
        %v1241 = vand.u32 %v1209, 3
        %v1242 = vand.u32 %v1210, 3
        %v1243 = vand.u32 %v1211, 3
        %v1244 = vand.u32 %v1212, 3
        %v1245 = vand.u32 %v1213, 3
        %v1246 = vand.u32 %v1214, 3
        %v1247 = vand.u32 %v1215, 3
        %v1248 = vand.u32 %v1216, 3
        %v1249 = vand.u32 %v1217, 3
        %v1250 = vand.u32 %v1218, 3
        %v1251 = vand.u32 %v1219, 3
        %v1252 = vand.u32 %v1220, 3
        %v1253 = vand.u32 %v1221, 3
        %v1254 = vand.u32 %v1222, 3
        %v1255 = vand.u32 %v1223, 3
        %v1256 = vand.u32 %v1224, 3
        %v1257 = vand.u32 %v1225, 3
        %v1258 = vand.u32 %v1226, 3
        %v1259 = vand.u32 %v1227, 3
        %v1260 = vand.u32 %v1228, 3
        %v1261 = vand.u32 %v1229, 3
        %v1262 = vand.u32 %v1230, 3
        %v1263 = vand.u32 %v1231, 3
        %v1264 = vand.u32 %v1232, 3
        %v1265 = vand.u32 %v1233, 3
        %v1266 = vand.u32 %v1234, 3
        %v1267 = vand.u32 %v1235, 3
        %vm1268 = vcmp.eq.s32.totalorder %v1236, 1
        %vm1269 = vcmp.eq.s32.totalorder %v1237, 1
        %vm1270 = vcmp.eq.s32.totalorder %v1238, 1
        %vm1271 = vcmp.eq.s32.totalorder %v1239, 1
        %vm1272 = vcmp.eq.s32.totalorder %v1240, 1
        %vm1273 = vcmp.eq.s32.totalorder %v1241, 1
        %vm1274 = vcmp.eq.s32.totalorder %v1242, 1
        %vm1275 = vcmp.eq.s32.totalorder %v1243, 1
        %vm1276 = vcmp.eq.s32.totalorder %v1244, 1
        %vm1277 = vcmp.eq.s32.totalorder %v1245, 1
        %vm1278 = vcmp.eq.s32.totalorder %v1246, 1
        %vm1279 = vcmp.eq.s32.totalorder %v1247, 1
        %vm1280 = vcmp.eq.s32.totalorder %v1248, 1
        %vm1281 = vcmp.eq.s32.totalorder %v1249, 1
        %vm1282 = vcmp.eq.s32.totalorder %v1250, 1
        %vm1283 = vcmp.eq.s32.totalorder %v1251, 1
        %vm1284 = vcmp.eq.s32.totalorder %v1252, 1
        %vm1285 = vcmp.eq.s32.totalorder %v1253, 1
        %vm1286 = vcmp.eq.s32.totalorder %v1254, 1
        %vm1287 = vcmp.eq.s32.totalorder %v1255, 1
        %vm1288 = vcmp.eq.s32.totalorder %v1256, 1
        %vm1289 = vcmp.eq.s32.totalorder %v1257, 1
        %vm1290 = vcmp.eq.s32.totalorder %v1258, 1
        %vm1291 = vcmp.eq.s32.totalorder %v1259, 1
        %vm1292 = vcmp.eq.s32.totalorder %v1260, 1
        %vm1293 = vcmp.eq.s32.totalorder %v1261, 1
        %vm1294 = vcmp.eq.s32.totalorder %v1262, 1
        %vm1295 = vcmp.eq.s32.totalorder %v1263, 1
        %vm1296 = vcmp.eq.s32.totalorder %v1264, 1
        %vm1297 = vcmp.eq.s32.totalorder %v1265, 1
        %vm1298 = vcmp.eq.s32.totalorder %v1266, 1
        %vm1299 = vcmp.eq.s32.totalorder %v1267, 1
        %vm1300 = vcmp.eq.s32.totalorder %v1236, 3
        %vm1301 = vcmp.eq.s32.totalorder %v1237, 3
        %vm1302 = vcmp.eq.s32.totalorder %v1238, 3
        %vm1303 = vcmp.eq.s32.totalorder %v1239, 3
        %vm1304 = vcmp.eq.s32.totalorder %v1240, 3
        %vm1305 = vcmp.eq.s32.totalorder %v1241, 3
        %vm1306 = vcmp.eq.s32.totalorder %v1242, 3
        %vm1307 = vcmp.eq.s32.totalorder %v1243, 3
        %vm1308 = vcmp.eq.s32.totalorder %v1244, 3
        %vm1309 = vcmp.eq.s32.totalorder %v1245, 3
        %vm1310 = vcmp.eq.s32.totalorder %v1246, 3
        %vm1311 = vcmp.eq.s32.totalorder %v1247, 3
        %vm1312 = vcmp.eq.s32.totalorder %v1248, 3
        %vm1313 = vcmp.eq.s32.totalorder %v1249, 3
        %vm1314 = vcmp.eq.s32.totalorder %v1250, 3
        %vm1315 = vcmp.eq.s32.totalorder %v1251, 3
        %vm1316 = vcmp.eq.s32.totalorder %v1252, 3
        %vm1317 = vcmp.eq.s32.totalorder %v1253, 3
        %vm1318 = vcmp.eq.s32.totalorder %v1254, 3
        %vm1319 = vcmp.eq.s32.totalorder %v1255, 3
        %vm1320 = vcmp.eq.s32.totalorder %v1256, 3
        %vm1321 = vcmp.eq.s32.totalorder %v1257, 3
        %vm1322 = vcmp.eq.s32.totalorder %v1258, 3
        %vm1323 = vcmp.eq.s32.totalorder %v1259, 3
        %vm1324 = vcmp.eq.s32.totalorder %v1260, 3
        %vm1325 = vcmp.eq.s32.totalorder %v1261, 3
        %vm1326 = vcmp.eq.s32.totalorder %v1262, 3
        %vm1327 = vcmp.eq.s32.totalorder %v1263, 3
        %vm1328 = vcmp.eq.s32.totalorder %v1264, 3
        %vm1329 = vcmp.eq.s32.totalorder %v1265, 3
        %vm1330 = vcmp.eq.s32.totalorder %v1266, 3
        %vm1331 = vcmp.eq.s32.totalorder %v1267, 3
        %vm1332 = vmor %vm1268, %vm1300
        %vm1333 = vmor %vm1269, %vm1301
        %vm1334 = vmor %vm1270, %vm1302
        %vm1335 = vmor %vm1271, %vm1303
        %vm1336 = vmor %vm1272, %vm1304
        %vm1337 = vmor %vm1273, %vm1305
        %vm1338 = vmor %vm1274, %vm1306
        %vm1339 = vmor %vm1275, %vm1307
        %vm1340 = vmor %vm1276, %vm1308
        %vm1341 = vmor %vm1277, %vm1309
        %vm1342 = vmor %vm1278, %vm1310
        %vm1343 = vmor %vm1279, %vm1311
        %vm1344 = vmor %vm1280, %vm1312
        %vm1345 = vmor %vm1281, %vm1313
        %vm1346 = vmor %vm1282, %vm1314
        %vm1347 = vmor %vm1283, %vm1315
        %vm1348 = vmor %vm1284, %vm1316
        %vm1349 = vmor %vm1285, %vm1317
        %vm1350 = vmor %vm1286, %vm1318
        %vm1351 = vmor %vm1287, %vm1319
        %vm1352 = vmor %vm1288, %vm1320
        %vm1353 = vmor %vm1289, %vm1321
        %vm1354 = vmor %vm1290, %vm1322
        %vm1355 = vmor %vm1291, %vm1323
        %vm1356 = vmor %vm1292, %vm1324
        %vm1357 = vmor %vm1293, %vm1325
        %vm1358 = vmor %vm1294, %vm1326
        %vm1359 = vmor %vm1295, %vm1327
        %vm1360 = vmor %vm1296, %vm1328
        %vm1361 = vmor %vm1297, %vm1329
        %vm1362 = vmor %vm1298, %vm1330
        %vm1363 = vmor %vm1299, %vm1331
        %v1364 = vsel %vm1332, %v1172, %v916
        %v1365 = vsel %vm1333, %v1173, %v917
        %v1366 = vsel %vm1334, %v1174, %v918
        %v1367 = vsel %vm1335, %v1175, %v919
        %v1368 = vsel %vm1336, %v1176, %v920
        %v1369 = vsel %vm1337, %v1177, %v921
        %v1370 = vsel %vm1338, %v1178, %v922
        %v1371 = vsel %vm1339, %v1179, %v923
        %v1372 = vsel %vm1340, %v1180, %v924
        %v1373 = vsel %vm1341, %v1181, %v925
        %v1374 = vsel %vm1342, %v1182, %v926
        %v1375 = vsel %vm1343, %v1183, %v927
        %v1376 = vsel %vm1344, %v1184, %v928
        %v1377 = vsel %vm1345, %v1185, %v929
        %v1378 = vsel %vm1346, %v1186, %v930
        %v1379 = vsel %vm1347, %v1187, %v931
        %v1380 = vsel %vm1348, %v1188, %v932
        %v1381 = vsel %vm1349, %v1189, %v933
        %v1382 = vsel %vm1350, %v1190, %v934
        %v1383 = vsel %vm1351, %v1191, %v935
        %v1384 = vsel %vm1352, %v1192, %v936
        %v1385 = vsel %vm1353, %v1193, %v937
        %v1386 = vsel %vm1354, %v1194, %v938
        %v1387 = vsel %vm1355, %v1195, %v939
        %v1388 = vsel %vm1356, %v1196, %v940
        %v1389 = vsel %vm1357, %v1197, %v941
        %v1390 = vsel %vm1358, %v1198, %v942
        %v1391 = vsel %vm1359, %v1199, %v943
        %v1392 = vsel %vm1360, %v1200, %v944
        %v1393 = vsel %vm1361, %v1201, %v945
        %v1394 = vsel %vm1362, %v1202, %v946
        %v1395 = vsel %vm1363, %v1203, %v947
        %v1396 = vsel %vm1332, %v916, %v1172
        %v1397 = vsel %vm1333, %v917, %v1173
        %v1398 = vsel %vm1334, %v918, %v1174
        %v1399 = vsel %vm1335, %v919, %v1175
        %v1400 = vsel %vm1336, %v920, %v1176
        %v1401 = vsel %vm1337, %v921, %v1177
        %v1402 = vsel %vm1338, %v922, %v1178
        %v1403 = vsel %vm1339, %v923, %v1179
        %v1404 = vsel %vm1340, %v924, %v1180
        %v1405 = vsel %vm1341, %v925, %v1181
        %v1406 = vsel %vm1342, %v926, %v1182
        %v1407 = vsel %vm1343, %v927, %v1183
        %v1408 = vsel %vm1344, %v928, %v1184
        %v1409 = vsel %vm1345, %v929, %v1185
        %v1410 = vsel %vm1346, %v930, %v1186
        %v1411 = vsel %vm1347, %v931, %v1187
        %v1412 = vsel %vm1348, %v932, %v1188
        %v1413 = vsel %vm1349, %v933, %v1189
        %v1414 = vsel %vm1350, %v934, %v1190
        %v1415 = vsel %vm1351, %v935, %v1191
        %v1416 = vsel %vm1352, %v936, %v1192
        %v1417 = vsel %vm1353, %v937, %v1193
        %v1418 = vsel %vm1354, %v938, %v1194
        %v1419 = vsel %vm1355, %v939, %v1195
        %v1420 = vsel %vm1356, %v940, %v1196
        %v1421 = vsel %vm1357, %v941, %v1197
        %v1422 = vsel %vm1358, %v942, %v1198
        %v1423 = vsel %vm1359, %v943, %v1199
        %v1424 = vsel %vm1360, %v944, %v1200
        %v1425 = vsel %vm1361, %v945, %v1201
        %v1426 = vsel %vm1362, %v946, %v1202
        %v1427 = vsel %vm1363, %v947, %v1203
        %vm1428 = vcmp.ge.s32.totalorder %v1236, 2
        %vm1429 = vcmp.ge.s32.totalorder %v1237, 2
        %vm1430 = vcmp.ge.s32.totalorder %v1238, 2
        %vm1431 = vcmp.ge.s32.totalorder %v1239, 2
        %vm1432 = vcmp.ge.s32.totalorder %v1240, 2
        %vm1433 = vcmp.ge.s32.totalorder %v1241, 2
        %vm1434 = vcmp.ge.s32.totalorder %v1242, 2
        %vm1435 = vcmp.ge.s32.totalorder %v1243, 2
        %vm1436 = vcmp.ge.s32.totalorder %v1244, 2
        %vm1437 = vcmp.ge.s32.totalorder %v1245, 2
        %vm1438 = vcmp.ge.s32.totalorder %v1246, 2
        %vm1439 = vcmp.ge.s32.totalorder %v1247, 2
        %vm1440 = vcmp.ge.s32.totalorder %v1248, 2
        %vm1441 = vcmp.ge.s32.totalorder %v1249, 2
        %vm1442 = vcmp.ge.s32.totalorder %v1250, 2
        %vm1443 = vcmp.ge.s32.totalorder %v1251, 2
        %vm1444 = vcmp.ge.s32.totalorder %v1252, 2
        %vm1445 = vcmp.ge.s32.totalorder %v1253, 2
        %vm1446 = vcmp.ge.s32.totalorder %v1254, 2
        %vm1447 = vcmp.ge.s32.totalorder %v1255, 2
        %vm1448 = vcmp.ge.s32.totalorder %v1256, 2
        %vm1449 = vcmp.ge.s32.totalorder %v1257, 2
        %vm1450 = vcmp.ge.s32.totalorder %v1258, 2
        %vm1451 = vcmp.ge.s32.totalorder %v1259, 2
        %vm1452 = vcmp.ge.s32.totalorder %v1260, 2
        %vm1453 = vcmp.ge.s32.totalorder %v1261, 2
        %vm1454 = vcmp.ge.s32.totalorder %v1262, 2
        %vm1455 = vcmp.ge.s32.totalorder %v1263, 2
        %vm1456 = vcmp.ge.s32.totalorder %v1264, 2
        %vm1457 = vcmp.ge.s32.totalorder %v1265, 2
        %vm1458 = vcmp.ge.s32.totalorder %v1266, 2
        %vm1459 = vcmp.ge.s32.totalorder %v1267, 2
        %v1460 = vsub.f32 0.0, %v1364
        %v1461 = vsub.f32 0.0, %v1365
        %v1462 = vsub.f32 0.0, %v1366
        %v1463 = vsub.f32 0.0, %v1367
        %v1464 = vsub.f32 0.0, %v1368
        %v1465 = vsub.f32 0.0, %v1369
        %v1466 = vsub.f32 0.0, %v1370
        %v1467 = vsub.f32 0.0, %v1371
        %v1468 = vsub.f32 0.0, %v1372
        %v1469 = vsub.f32 0.0, %v1373
        %v1470 = vsub.f32 0.0, %v1374
        %v1471 = vsub.f32 0.0, %v1375
        %v1472 = vsub.f32 0.0, %v1376
        %v1473 = vsub.f32 0.0, %v1377
        %v1474 = vsub.f32 0.0, %v1378
        %v1475 = vsub.f32 0.0, %v1379
        %v1476 = vsub.f32 0.0, %v1380
        %v1477 = vsub.f32 0.0, %v1381
        %v1478 = vsub.f32 0.0, %v1382
        %v1479 = vsub.f32 0.0, %v1383
        %v1480 = vsub.f32 0.0, %v1384
        %v1481 = vsub.f32 0.0, %v1385
        %v1482 = vsub.f32 0.0, %v1386
        %v1483 = vsub.f32 0.0, %v1387
        %v1484 = vsub.f32 0.0, %v1388
        %v1485 = vsub.f32 0.0, %v1389
        %v1486 = vsub.f32 0.0, %v1390
        %v1487 = vsub.f32 0.0, %v1391
        %v1488 = vsub.f32 0.0, %v1392
        %v1489 = vsub.f32 0.0, %v1393
        %v1490 = vsub.f32 0.0, %v1394
        %v1491 = vsub.f32 0.0, %v1395
        %v1492 = vsel %vm1428, %v1460, %v1364
        %v1493 = vsel %vm1429, %v1461, %v1365
        %v1494 = vsel %vm1430, %v1462, %v1366
        %v1495 = vsel %vm1431, %v1463, %v1367
        %v1496 = vsel %vm1432, %v1464, %v1368
        %v1497 = vsel %vm1433, %v1465, %v1369
        %v1498 = vsel %vm1434, %v1466, %v1370
        %v1499 = vsel %vm1435, %v1467, %v1371
        %v1500 = vsel %vm1436, %v1468, %v1372
        %v1501 = vsel %vm1437, %v1469, %v1373
        %v1502 = vsel %vm1438, %v1470, %v1374
        %v1503 = vsel %vm1439, %v1471, %v1375
        %v1504 = vsel %vm1440, %v1472, %v1376
        %v1505 = vsel %vm1441, %v1473, %v1377
        %v1506 = vsel %vm1442, %v1474, %v1378
        %v1507 = vsel %vm1443, %v1475, %v1379
        %v1508 = vsel %vm1444, %v1476, %v1380
        %v1509 = vsel %vm1445, %v1477, %v1381
        %v1510 = vsel %vm1446, %v1478, %v1382
        %v1511 = vsel %vm1447, %v1479, %v1383
        %v1512 = vsel %vm1448, %v1480, %v1384
        %v1513 = vsel %vm1449, %v1481, %v1385
        %v1514 = vsel %vm1450, %v1482, %v1386
        %v1515 = vsel %vm1451, %v1483, %v1387
        %v1516 = vsel %vm1452, %v1484, %v1388
        %v1517 = vsel %vm1453, %v1485, %v1389
        %v1518 = vsel %vm1454, %v1486, %v1390
        %v1519 = vsel %vm1455, %v1487, %v1391
        %v1520 = vsel %vm1456, %v1488, %v1392
        %v1521 = vsel %vm1457, %v1489, %v1393
        %v1522 = vsel %vm1458, %v1490, %v1394
        %v1523 = vsel %vm1459, %v1491, %v1395
        %vm1524 = vcmp.eq.s32.totalorder %v1236, 2
        %vm1525 = vcmp.eq.s32.totalorder %v1237, 2
        %vm1526 = vcmp.eq.s32.totalorder %v1238, 2
        %vm1527 = vcmp.eq.s32.totalorder %v1239, 2
        %vm1528 = vcmp.eq.s32.totalorder %v1240, 2
        %vm1529 = vcmp.eq.s32.totalorder %v1241, 2
        %vm1530 = vcmp.eq.s32.totalorder %v1242, 2
        %vm1531 = vcmp.eq.s32.totalorder %v1243, 2
        %vm1532 = vcmp.eq.s32.totalorder %v1244, 2
        %vm1533 = vcmp.eq.s32.totalorder %v1245, 2
        %vm1534 = vcmp.eq.s32.totalorder %v1246, 2
        %vm1535 = vcmp.eq.s32.totalorder %v1247, 2
        %vm1536 = vcmp.eq.s32.totalorder %v1248, 2
        %vm1537 = vcmp.eq.s32.totalorder %v1249, 2
        %vm1538 = vcmp.eq.s32.totalorder %v1250, 2
        %vm1539 = vcmp.eq.s32.totalorder %v1251, 2
        %vm1540 = vcmp.eq.s32.totalorder %v1252, 2
        %vm1541 = vcmp.eq.s32.totalorder %v1253, 2
        %vm1542 = vcmp.eq.s32.totalorder %v1254, 2
        %vm1543 = vcmp.eq.s32.totalorder %v1255, 2
        %vm1544 = vcmp.eq.s32.totalorder %v1256, 2
        %vm1545 = vcmp.eq.s32.totalorder %v1257, 2
        %vm1546 = vcmp.eq.s32.totalorder %v1258, 2
        %vm1547 = vcmp.eq.s32.totalorder %v1259, 2
        %vm1548 = vcmp.eq.s32.totalorder %v1260, 2
        %vm1549 = vcmp.eq.s32.totalorder %v1261, 2
        %vm1550 = vcmp.eq.s32.totalorder %v1262, 2
        %vm1551 = vcmp.eq.s32.totalorder %v1263, 2
        %vm1552 = vcmp.eq.s32.totalorder %v1264, 2
        %vm1553 = vcmp.eq.s32.totalorder %v1265, 2
        %vm1554 = vcmp.eq.s32.totalorder %v1266, 2
        %vm1555 = vcmp.eq.s32.totalorder %v1267, 2
        %vm1556 = vmor %vm1268, %vm1524
        %vm1557 = vmor %vm1269, %vm1525
        %vm1558 = vmor %vm1270, %vm1526
        %vm1559 = vmor %vm1271, %vm1527
        %vm1560 = vmor %vm1272, %vm1528
        %vm1561 = vmor %vm1273, %vm1529
        %vm1562 = vmor %vm1274, %vm1530
        %vm1563 = vmor %vm1275, %vm1531
        %vm1564 = vmor %vm1276, %vm1532
        %vm1565 = vmor %vm1277, %vm1533
        %vm1566 = vmor %vm1278, %vm1534
        %vm1567 = vmor %vm1279, %vm1535
        %vm1568 = vmor %vm1280, %vm1536
        %vm1569 = vmor %vm1281, %vm1537
        %vm1570 = vmor %vm1282, %vm1538
        %vm1571 = vmor %vm1283, %vm1539
        %vm1572 = vmor %vm1284, %vm1540
        %vm1573 = vmor %vm1285, %vm1541
        %vm1574 = vmor %vm1286, %vm1542
        %vm1575 = vmor %vm1287, %vm1543
        %vm1576 = vmor %vm1288, %vm1544
        %vm1577 = vmor %vm1289, %vm1545
        %vm1578 = vmor %vm1290, %vm1546
        %vm1579 = vmor %vm1291, %vm1547
        %vm1580 = vmor %vm1292, %vm1548
        %vm1581 = vmor %vm1293, %vm1549
        %vm1582 = vmor %vm1294, %vm1550
        %vm1583 = vmor %vm1295, %vm1551
        %vm1584 = vmor %vm1296, %vm1552
        %vm1585 = vmor %vm1297, %vm1553
        %vm1586 = vmor %vm1298, %vm1554
        %vm1587 = vmor %vm1299, %vm1555
        %v1588 = vsub.f32 0.0, %v1396
        %v1589 = vsub.f32 0.0, %v1397
        %v1590 = vsub.f32 0.0, %v1398
        %v1591 = vsub.f32 0.0, %v1399
        %v1592 = vsub.f32 0.0, %v1400
        %v1593 = vsub.f32 0.0, %v1401
        %v1594 = vsub.f32 0.0, %v1402
        %v1595 = vsub.f32 0.0, %v1403
        %v1596 = vsub.f32 0.0, %v1404
        %v1597 = vsub.f32 0.0, %v1405
        %v1598 = vsub.f32 0.0, %v1406
        %v1599 = vsub.f32 0.0, %v1407
        %v1600 = vsub.f32 0.0, %v1408
        %v1601 = vsub.f32 0.0, %v1409
        %v1602 = vsub.f32 0.0, %v1410
        %v1603 = vsub.f32 0.0, %v1411
        %v1604 = vsub.f32 0.0, %v1412
        %v1605 = vsub.f32 0.0, %v1413
        %v1606 = vsub.f32 0.0, %v1414
        %v1607 = vsub.f32 0.0, %v1415
        %v1608 = vsub.f32 0.0, %v1416
        %v1609 = vsub.f32 0.0, %v1417
        %v1610 = vsub.f32 0.0, %v1418
        %v1611 = vsub.f32 0.0, %v1419
        %v1612 = vsub.f32 0.0, %v1420
        %v1613 = vsub.f32 0.0, %v1421
        %v1614 = vsub.f32 0.0, %v1422
        %v1615 = vsub.f32 0.0, %v1423
        %v1616 = vsub.f32 0.0, %v1424
        %v1617 = vsub.f32 0.0, %v1425
        %v1618 = vsub.f32 0.0, %v1426
        %v1619 = vsub.f32 0.0, %v1427
        %v1620 = vsel %vm1556, %v1588, %v1396
        %v1621 = vsel %vm1557, %v1589, %v1397
        %v1622 = vsel %vm1558, %v1590, %v1398
        %v1623 = vsel %vm1559, %v1591, %v1399
        %v1624 = vsel %vm1560, %v1592, %v1400
        %v1625 = vsel %vm1561, %v1593, %v1401
        %v1626 = vsel %vm1562, %v1594, %v1402
        %v1627 = vsel %vm1563, %v1595, %v1403
        %v1628 = vsel %vm1564, %v1596, %v1404
        %v1629 = vsel %vm1565, %v1597, %v1405
        %v1630 = vsel %vm1566, %v1598, %v1406
        %v1631 = vsel %vm1567, %v1599, %v1407
        %v1632 = vsel %vm1568, %v1600, %v1408
        %v1633 = vsel %vm1569, %v1601, %v1409
        %v1634 = vsel %vm1570, %v1602, %v1410
        %v1635 = vsel %vm1571, %v1603, %v1411
        %v1636 = vsel %vm1572, %v1604, %v1412
        %v1637 = vsel %vm1573, %v1605, %v1413
        %v1638 = vsel %vm1574, %v1606, %v1414
        %v1639 = vsel %vm1575, %v1607, %v1415
        %v1640 = vsel %vm1576, %v1608, %v1416
        %v1641 = vsel %vm1577, %v1609, %v1417
        %v1642 = vsel %vm1578, %v1610, %v1418
        %v1643 = vsel %vm1579, %v1611, %v1419
        %v1644 = vsel %vm1580, %v1612, %v1420
        %v1645 = vsel %vm1581, %v1613, %v1421
        %v1646 = vsel %vm1582, %v1614, %v1422
        %v1647 = vsel %vm1583, %v1615, %v1423
        %v1648 = vsel %vm1584, %v1616, %v1424
        %v1649 = vsel %vm1585, %v1617, %v1425
        %v1650 = vsel %vm1586, %v1618, %v1426
        %v1651 = vsel %vm1587, %v1619, %v1427
        %v1653 = vlaneseq
        %v1654 = vshrl.u32 %v1653, 7
        %v1655 = vsub.s32 0, %v1654
        %v1656 = vrot.slane %v205, %v1655
        %v1658 = vmul.f32 %v1656, %v1492
        %v1659 = vmul.f32 %v1656, %v1493
        %v1660 = vmul.f32 %v1656, %v1494
        %v1661 = vmul.f32 %v1656, %v1495
        %v1662 = vmul.f32 %v1656, %v1496
        %v1663 = vmul.f32 %v1656, %v1497
        %v1664 = vmul.f32 %v1656, %v1498
        %v1665 = vmul.f32 %v1656, %v1499
        %v1666 = vmul.f32 %v1656, %v1500
        %v1667 = vmul.f32 %v1656, %v1501
        %v1668 = vmul.f32 %v1656, %v1502
        %v1669 = vmul.f32 %v1656, %v1503
        %v1670 = vmul.f32 %v1656, %v1504
        %v1671 = vmul.f32 %v1656, %v1505
        %v1672 = vmul.f32 %v1656, %v1506
        %v1673 = vmul.f32 %v1656, %v1507
        %v1674 = vmul.f32 %v1656, %v1508
        %v1675 = vmul.f32 %v1656, %v1509
        %v1676 = vmul.f32 %v1656, %v1510
        %v1677 = vmul.f32 %v1656, %v1511
        %v1678 = vmul.f32 %v1656, %v1512
        %v1679 = vmul.f32 %v1656, %v1513
        %v1680 = vmul.f32 %v1656, %v1514
        %v1681 = vmul.f32 %v1656, %v1515
        %v1682 = vmul.f32 %v1656, %v1516
        %v1683 = vmul.f32 %v1656, %v1517
        %v1684 = vmul.f32 %v1656, %v1518
        %v1685 = vmul.f32 %v1656, %v1519
        %v1686 = vmul.f32 %v1656, %v1520
        %v1687 = vmul.f32 %v1656, %v1521
        %v1688 = vmul.f32 %v1656, %v1522
        %v1689 = vmul.f32 %v1656, %v1523
        %1690 = vst [vmem:[%s164] sm:$0xff] %v1658
        %1691 = vst [vmem:[%s164 + $0x10] sm:$0xff] %v1659
        %1692 = vst [vmem:[%s164 + $0x20] sm:$0xff] %v1660
        %1693 = vst [vmem:[%s164 + $0x30] sm:$0xff] %v1661
        %1694 = vst [vmem:[%s164 + $0x40] sm:$0xff] %v1662
        %1695 = vst [vmem:[%s164 + $0x50] sm:$0xff] %v1663
        %1696 = vst [vmem:[%s164 + $0x60] sm:$0xff] %v1664
        %1697 = vst [vmem:[%s164 + $0x70] sm:$0xff] %v1665
        %1698 = vst [vmem:[%s164 + $0x80] sm:$0xff] %v1666
        %1699 = vst [vmem:[%s164 + $0x90] sm:$0xff] %v1667
        %1700 = vst [vmem:[%s164 + $0xa0] sm:$0xff] %v1668
        %1701 = vst [vmem:[%s164 + $0xb0] sm:$0xff] %v1669
        %1702 = vst [vmem:[%s164 + $0xc0] sm:$0xff] %v1670
        %1703 = vst [vmem:[%s164 + $0xd0] sm:$0xff] %v1671
        %1704 = vst [vmem:[%s164 + $0xe0] sm:$0xff] %v1672
        %1705 = vst [vmem:[%s164 + $0xf0] sm:$0xff] %v1673
        %1706 = vst [vmem:[%s164 + $0x100] sm:$0xff] %v1674
        %1707 = vst [vmem:[%s164 + $0x110] sm:$0xff] %v1675
        %1708 = vst [vmem:[%s164 + $0x120] sm:$0xff] %v1676
        %1709 = vst [vmem:[%s164 + $0x130] sm:$0xff] %v1677
        %1710 = vst [vmem:[%s164 + $0x140] sm:$0xff] %v1678
        %1711 = vst [vmem:[%s164 + $0x150] sm:$0xff] %v1679
        %1712 = vst [vmem:[%s164 + $0x160] sm:$0xff] %v1680
        %1713 = vst [vmem:[%s164 + $0x170] sm:$0xff] %v1681
        %1714 = vst [vmem:[%s164 + $0x180] sm:$0xff] %v1682
        %1715 = vst [vmem:[%s164 + $0x190] sm:$0xff] %v1683
        %1716 = vst [vmem:[%s164 + $0x1a0] sm:$0xff] %v1684
        %1717 = vst [vmem:[%s164 + $0x1b0] sm:$0xff] %v1685
        %1718 = vst [vmem:[%s164 + $0x1c0] sm:$0xff] %v1686
        %1719 = vst [vmem:[%s164 + $0x1d0] sm:$0xff] %v1687
        %1720 = vst [vmem:[%s164 + $0x1e0] sm:$0xff] %v1688
        %1721 = vst [vmem:[%s164 + $0x1f0] sm:$0xff] %v1689
        %v1722 = vmul.f32 %v1656, %v1620
        %v1723 = vmul.f32 %v1656, %v1621
        %v1724 = vmul.f32 %v1656, %v1622
        %v1725 = vmul.f32 %v1656, %v1623
        %v1726 = vmul.f32 %v1656, %v1624
        %v1727 = vmul.f32 %v1656, %v1625
        %v1728 = vmul.f32 %v1656, %v1626
        %v1729 = vmul.f32 %v1656, %v1627
        %v1730 = vmul.f32 %v1656, %v1628
        %v1731 = vmul.f32 %v1656, %v1629
        %v1732 = vmul.f32 %v1656, %v1630
        %v1733 = vmul.f32 %v1656, %v1631
        %v1734 = vmul.f32 %v1656, %v1632
        %v1735 = vmul.f32 %v1656, %v1633
        %v1736 = vmul.f32 %v1656, %v1634
        %v1737 = vmul.f32 %v1656, %v1635
        %v1738 = vmul.f32 %v1656, %v1636
        %v1739 = vmul.f32 %v1656, %v1637
        %v1740 = vmul.f32 %v1656, %v1638
        %v1741 = vmul.f32 %v1656, %v1639
        %v1742 = vmul.f32 %v1656, %v1640
        %v1743 = vmul.f32 %v1656, %v1641
        %v1744 = vmul.f32 %v1656, %v1642
        %v1745 = vmul.f32 %v1656, %v1643
        %v1746 = vmul.f32 %v1656, %v1644
        %v1747 = vmul.f32 %v1656, %v1645
        %v1748 = vmul.f32 %v1656, %v1646
        %v1749 = vmul.f32 %v1656, %v1647
        %v1750 = vmul.f32 %v1656, %v1648
        %v1751 = vmul.f32 %v1656, %v1649
        %v1752 = vmul.f32 %v1656, %v1650
        %v1753 = vmul.f32 %v1656, %v1651
        %1754 = vst [vmem:[%s164 + $0x8] sm:$0xff] %v1722
        %1755 = vst [vmem:[%s164 + $0x18] sm:$0xff] %v1723
        %1756 = vst [vmem:[%s164 + $0x28] sm:$0xff] %v1724
        %1757 = vst [vmem:[%s164 + $0x38] sm:$0xff] %v1725
        %1758 = vst [vmem:[%s164 + $0x48] sm:$0xff] %v1726
        %1759 = vst [vmem:[%s164 + $0x58] sm:$0xff] %v1727
        %1760 = vst [vmem:[%s164 + $0x68] sm:$0xff] %v1728
        %1761 = vst [vmem:[%s164 + $0x78] sm:$0xff] %v1729
        %1762 = vst [vmem:[%s164 + $0x88] sm:$0xff] %v1730
        %1763 = vst [vmem:[%s164 + $0x98] sm:$0xff] %v1731
        %1764 = vst [vmem:[%s164 + $0xa8] sm:$0xff] %v1732
        %1765 = vst [vmem:[%s164 + $0xb8] sm:$0xff] %v1733
        %1766 = vst [vmem:[%s164 + $0xc8] sm:$0xff] %v1734
        %1767 = vst [vmem:[%s164 + $0xd8] sm:$0xff] %v1735
        %1768 = vst [vmem:[%s164 + $0xe8] sm:$0xff] %v1736
        %1769 = vst [vmem:[%s164 + $0xf8] sm:$0xff] %v1737
        %1770 = vst [vmem:[%s164 + $0x108] sm:$0xff] %v1738
        %1771 = vst [vmem:[%s164 + $0x118] sm:$0xff] %v1739
        %1772 = vst [vmem:[%s164 + $0x128] sm:$0xff] %v1740
        %1773 = vst [vmem:[%s164 + $0x138] sm:$0xff] %v1741
        %1774 = vst [vmem:[%s164 + $0x148] sm:$0xff] %v1742
        %1775 = vst [vmem:[%s164 + $0x158] sm:$0xff] %v1743
        %1776 = vst [vmem:[%s164 + $0x168] sm:$0xff] %v1744
        %1777 = vst [vmem:[%s164 + $0x178] sm:$0xff] %v1745
        %1778 = vst [vmem:[%s164 + $0x188] sm:$0xff] %v1746
        %1779 = vst [vmem:[%s164 + $0x198] sm:$0xff] %v1747
        %1780 = vst [vmem:[%s164 + $0x1a8] sm:$0xff] %v1748
        %1781 = vst [vmem:[%s164 + $0x1b8] sm:$0xff] %v1749
        %1782 = vst [vmem:[%s164 + $0x1c8] sm:$0xff] %v1750
        %1783 = vst [vmem:[%s164 + $0x1d8] sm:$0xff] %v1751
        %1784 = vst [vmem:[%s164 + $0x1e8] sm:$0xff] %v1752
        %1785 = vst [vmem:[%s164 + $0x1f8] sm:$0xff] %v1753
        %s1786 = sand.u32 %s93, 1
        %s1787 = scalar_lea.sflag [#allocation3], %s1786
        %s1788 = sand.u32 %s93, 1
        %s1789 = smul.addr %s1788, 512
        %s1790 = scalar_lea.vmem [#allocation2], %s1789
        // Predicated region
        $region33: #{tpu_custom_call.1} parent=31 // pred_check
          %p1791 = pneg %p103
        $region34: #{tpu_custom_call.1} parent=31 // pred_check_branch
          %1793 = sbr.rel (%p1791) target = $region36
        $region35: #{tpu_custom_call.1} parent=31 // pred_region
          %s1794 = smul.u32 32, %s17
          %s1796 = ssub.s32 8192, 8192
          %1797 = vsyncadd %s1787, %s1796
          %s1798 = smul.addr %s1794, 2
          %s1799 = smul.addr %s1798, 128
          %s1800 = scalar_lea.hbm %s3, %s1799
          %s1801 = sshll.u32 %s1790, 4
          %s1802 = int_to_ptr.vmem [resolvable:$true] %s1801
          %1807 = dma.vmem_to_hbm [thread:$0]  %s1802, 8192, %s1800, %s1787, 256, 256, 16
        $region36: #{tpu_custom_call.1} parent=31 // pred_fallthru
          _
      $region32: #{tpu_custom_call.1} parent=5 // pred_fallthru
        _
      %p1808 = scmp.le.s32.totalorder 2, %s12
      // Predicated region
      $region37: #{tpu_custom_call.1} parent=5 // pred_check
        %p1809 = pneg %p1808
      $region38: #{tpu_custom_call.1} parent=5 // pred_check_branch
        %1811 = sbr.rel (%p1809) target = $region40
      $region39: #{tpu_custom_call.1} parent=5 // pred_region
        %s1812 = ssub.s32 %s12, 2
        // Predicated region
        $region41: #{tpu_custom_call.1} parent=39 // pred_check
          %p1813 = pneg %p109
        $region42: #{tpu_custom_call.1} parent=39 // pred_check_branch
          %1815 = sbr.rel (%p1813) target = $region44
        $region43: #{tpu_custom_call.1} parent=39 // pred_region
          %s1816 = sand.u32 %s94, 1
          %s1817 = scalar_lea.sflag [#allocation3], %s1816
          %s1818 = sand.u32 %s94, 1
          %s1819 = smul.addr %s1818, 512
          %s1820 = scalar_lea.vmem [#allocation2], %s1819
          %1821 = dma.done %s1817, 8192
        $region44: #{tpu_custom_call.1} parent=39 // pred_fallthru
          _
      $region40: #{tpu_custom_call.1} parent=5 // pred_fallthru
        _
    $region6: #{tpu_custom_call.1} parent=1 // loop_footer
      %s16 = sadd.s32 1, %s12
    $region7: #{tpu_custom_call.1} parent=1 // loop_footer_branch
      %11 = sbr.rel target = $region3
    $region8: #{tpu_custom_call.1} parent=1 // loop_exit
      _
    %1822 = vsyncpa [#allocation3], 1
    %s1823 = scalar_lea.sflag [#allocation3], 1
    %1824 = vsyncpa %s1823, 1

</llo_original>
